<compile_context>
chip_gen: v6e
topology: v6e:2x2x1
jax: 0.10.0
libtpu: 0.0.40
codegen_flags: <defaults>
</compile_context>

<pallas_src>
import functools
import math

import jax
import jax.numpy as jnp
from jax import lax
from jax.experimental import pallas as pl
from jax.experimental.pallas import tpu as pltpu

EPS = 1e-4                 # RALMU_block.forward eps
H1, H2 = 130, 75           # MLP hidden sizes from the spec
H1_PAD, H2_PAD = 256, 128  # lane-aligned zero-padded hidden sizes (numerically exact)
APPROX_RECIPROCAL = True   # EUP approximate reciprocal (~1e-4 rel err); False = exact divide


def _round_up(x, m):
    return (x + m - 1) // m * m


# ----------------------------------------------------------------------------
# Fused kernel: batched Aw+Ah MLP, loop-free unflatten, both multiplicative updates.
# ----------------------------------------------------------------------------
def ralmu_block_kernel(m_ref, w_ref, h_ref, x_ref,
                       w0_ref, b0_ref, w1_ref, b1_ref, w2_ref, b2_ref,
                       maskw_ref, unflw_ref, maskh_ref, unflh_ref,
                       wn_ref, hn_ref,
                       *, eps, approx_recip, mm_dtype):
    f, l = wn_ref.shape
    _, t = hn_ref.shape
    n_w_pad = maskw_ref.shape[1]
    n_h_pad = maskh_ref.shape[1]

    def cast(x):
        return x if x.dtype == mm_dtype else x.astype(mm_dtype)

    def mm(a, b):                      # a @ b
        return jnp.dot(cast(a), cast(b), preferred_element_type=jnp.float32)

    def mm_nt(a, b):                   # a @ b^T  (contract last dims)
        return lax.dot_general(cast(a), cast(b), (((1,), (1,)), ((), ())),
                               preferred_element_type=jnp.float32)

    def mm_tn(a, b):                   # a^T @ b  (contract first dims)
        return lax.dot_general(cast(a), cast(b), (((0,), (0,)), ((), ())),
                               preferred_element_type=jnp.float32)

    def recip(x):
        if approx_recip:
            return pl.reciprocal(x, approx=True)   # EUP vrcp -> frees the VALU slot
        return 1.0 / x

    M = m_ref[...]            # (f, t)
    W = w_ref[...]            # (f, l)
    H = h_ref[...]            # (l, t)

    # ---------------- Batched Aw/Ah MLP (block-diagonal weights, 3 matmuls total) -------
    y = jnp.maximum(mm(x_ref[...], w0_ref[...]) + b0_ref[...], 0.0)   # (1, 2*H1_PAD)
    y = jnp.maximum(mm(y, w1_ref[...]) + b1_ref[...], 0.0)            # (1, 2*H2_PAD)
    y = jnp.maximum(mm(y, w2_ref[...]) + b2_ref[...], 0.0)            # (1, n_w_pad+n_h_pad)

    # ---------------- Loop-free unflatten of the MLP outputs ----------------
    # (1, n_pad) -> (rows, cols): sublane broadcast + constant mask + one MXU matmul.
    aw_flat = y[:, :n_w_pad]                                           # vec(Aw_out), padded
    ah_flat = y[:, n_w_pad:]                                           # vec(Ah_out), padded
    aw = jnp.dot(jnp.broadcast_to(aw_flat, (f, n_w_pad)) * maskw_ref[...],
                 unflw_ref[...], preferred_element_type=jnp.float32)   # (f, l)
    ah = jnp.dot(jnp.broadcast_to(ah_flat, (l, n_h_pad)) * maskh_ref[...],
                 unflh_ref[...], preferred_element_type=jnp.float32)   # (l, t)

    # ---------------- W update (denominator via the tiny (l, l) Gram) ----------------
    numer_W = mm_nt(M, H)                              # (f, l)  = M @ H^T
    gram_H = mm_nt(H, H)                               # (l, l)  = H @ H^T
    denom_W = mm(W, gram_H) + eps                      # (f, l)
    W_new = W * aw * numer_W * recip(denom_W)          # f32 elementwise (v5e-safe)
    wn_ref[...] = W_new

    # ---------------- H update ----------------
    numer_H = mm_tn(W_new, M)                          # (l, t)  = W_new^T @ M
    gram_W = mm_tn(W_new, W_new)                       # (l, l)  = W_new^T @ W_new
    denom_H = mm(gram_W, H) + eps                      # (l, t)
    hn_ref[...] = H * ah * numer_H * recip(denom_H)


# ----------------------------------------------------------------------------
# Wrapper-side constant construction.
# ----------------------------------------------------------------------------
def build_fused_mlp_params(aw_params, ah_params, n_w, n_h, n_w_pad, n_h_pad):
    """Block-diagonal, zero-padded weights so both MLPs run as one 3-matmul pass.
    Exact: cross blocks are zero, padded hidden units see bias 0 -> ReLU(0)=0 and hit
    zero rows/cols of the next layer."""
    aw_w0, aw_b0, aw_w1, aw_b1, aw_w2, aw_b2 = aw_params
    ah_w0, ah_b0, ah_w1, ah_b1, ah_w2, ah_b2 = ah_params
    nin = n_w_pad + n_h_pad

    W0 = jnp.zeros((nin, 2 * H1_PAD), jnp.float32)
    W0 = W0.at[:n_w, :H1].set(aw_w0)
    W0 = W0.at[n_w_pad:n_w_pad + n_h, H1_PAD:H1_PAD + H1].set(ah_w0)
    B0 = jnp.zeros((1, 2 * H1_PAD), jnp.float32)
    B0 = B0.at[:, :H1].set(aw_b0.reshape(1, -1))
    B0 = B0.at[:, H1_PAD:H1_PAD + H1].set(ah_b0.reshape(1, -1))

    W1 = jnp.zeros((2 * H1_PAD, 2 * H2_PAD), jnp.float32)
    W1 = W1.at[:H1, :H2].set(aw_w1)
    W1 = W1.at[H1_PAD:H1_PAD + H1, H2_PAD:H2_PAD + H2].set(ah_w1)
    B1 = jnp.zeros((1, 2 * H2_PAD), jnp.float32)
    B1 = B1.at[:, :H2].set(aw_b1.reshape(1, -1))
    B1 = B1.at[:, H2_PAD:H2_PAD + H2].set(ah_b1.reshape(1, -1))

    W2 = jnp.zeros((2 * H2_PAD, nin), jnp.float32)
    W2 = W2.at[:H2, :n_w].set(aw_w2)
    W2 = W2.at[H2_PAD:H2_PAD + H2, n_w_pad:n_w_pad + n_h].set(ah_w2)
    B2 = jnp.zeros((1, nin), jnp.float32)
    B2 = B2.at[:, :n_w].set(aw_b2.reshape(1, -1))
    B2 = B2.at[:, n_w_pad:n_w_pad + n_h].set(ah_b2.reshape(1, -1))
    return W0, B0, W1, B1, W2, B2


def build_unflatten_consts(rows, cols, n, n_pad):
    """Constants for the loop-free unflatten:
       out[i, j] = sum_k v[k] * mask[i, k] * unfl[k, j]  == v[i*cols + j]."""
    k = jnp.arange(n_pad)
    valid = k < n
    mask = (((k[None, :] // cols) == jnp.arange(rows)[:, None]) & valid[None, :])
    unfl = (((k[:, None] % cols) == jnp.arange(cols)[None, :]) & valid[:, None])
    return mask.astype(jnp.float32), unfl.astype(jnp.float32)


# ----------------------------------------------------------------------------
# Public entry point: single fused pallas_call.
# ----------------------------------------------------------------------------
def ralmu_block(M, W, H, aw_params, ah_params, *, eps=EPS,
                approx_recip=APPROX_RECIPROCAL, matmul_dtype=jnp.float32,
                donate_wh=False):
    f, l = W.shape
    l2, t = H.shape
    assert l2 == l and M.shape == (f, t)
    n_w, n_h = f * l, l * t
    n_w_pad, n_h_pad = _round_up(n_w, 128), _round_up(n_h, 128)
    nin = n_w_pad + n_h_pad

    W0, B0, W1, B1, W2, B2 = build_fused_mlp_params(
        aw_params, ah_params, n_w, n_h, n_w_pad, n_h_pad)
    maskw, unflw = build_unflatten_consts(f, l, n_w, n_w_pad)
    maskh, unflh = build_unflatten_consts(l, t, n_h, n_h_pad)

    # Concatenated, lane-padded flat MLP input [vec(W) | vec(H)] (free XLA reshapes).
    x_cat = jnp.zeros((1, nin), jnp.float32)
    x_cat = x_cat.at[:, :n_w].set(W.reshape(1, n_w))
    x_cat = x_cat.at[:, n_w_pad:n_w_pad + n_h].set(H.reshape(1, n_h))

    inputs = (M, W, H, x_cat, W0, B0, W1, B1, W2, B2, maskw, unflw, maskh, unflh)

    # Advisory cost estimate (lets XLA schedule neighbours / layer-weight prefetch).
    mlp_flops = 2 * nin * (2 * H1_PAD) + 2 * (2 * H1_PAD) * (2 * H2_PAD) \
        + 2 * (2 * H2_PAD) * nin
    unfl_flops = 2 * f * n_w_pad * l + 2 * l * n_h_pad * t + f * n_w_pad + l * n_h_pad
    upd_flops = 2 * f * t * l + 2 * l * t * l + 2 * f * l * l \
        + 2 * l * f * t + 2 * l * l * f + 2 * l * l * t
    ew_flops = 4 * f * l + 4 * l * t
    bytes_accessed = sum(int(a.size) * a.dtype.itemsize for a in inputs) \
        + (f * l + l * t) * 4
    cost = pl.CostEstimate(
        flops=int(mlp_flops + unfl_flops + upd_flops + ew_flops),
        transcendentals=int((f * l + l * t) if approx_recip else 0),
        bytes_accessed=int(bytes_accessed))

    kernel = functools.partial(ralmu_block_kernel, eps=float(eps),
                               approx_recip=bool(approx_recip), mm_dtype=matmul_dtype)
    vmem = lambda: pl.BlockSpec(memory_space=pltpu.MemorySpace.VMEM)

    # donate_wh=True (W->W_new, H->H_new) reuses HBM buffers when the block is applied
    # iteratively in an unrolled NMF stack; safe because inputs are fully in VMEM before
    # outputs are written back.
    io_aliases = {1: 0, 2: 1} if donate_wh else {}

    return pl.pallas_call(
        kernel,
        out_shape=(jax.ShapeDtypeStruct((f, l), jnp.float32),
                   jax.ShapeDtypeStruct((l, t), jnp.float32)),
        in_specs=[vmem() for _ in inputs],
        out_specs=(vmem(), vmem()),
        input_output_aliases=io_aliases,
        cost_estimate=cost,
    )(*inputs)


# ----------------------------------------------------------------------------
# Pure-JAX reference (mirrors the PyTorch forward exactly) + param init.
# ----------------------------------------------------------------------------
def ralmu_block_ref(M, W, H, aw_params, ah_params, eps=EPS):
    def mlp(x, params, shape):
        w0, b0, w1, b1, w2, b2 = params
        y = jnp.maximum(x.reshape(1, -1) @ w0 + b0, 0.0)
        y = jnp.maximum(y @ w1 + b1, 0.0)
        y = jnp.maximum(y @ w2 + b2, 0.0)
        return y.reshape(shape)

    aw = mlp(W, aw_params, W.shape)
    numer_W = M @ H.T
    denom_W = W @ (H @ H.T) + eps
    W_new = W * aw * (numer_W / denom_W)
    ah = mlp(H, ah_params, H.shape)
    numer_H = W_new.T @ M
    denom_H = (W_new.T @ W_new) @ H + eps
    H_new = H * ah * (numer_H / denom_H)
    return W_new, H_new


def init_linear(key, fan_in, fan_out):
    k1, k2 = jax.random.split(key)
    bound = 1.0 / math.sqrt(fan_in)   # PyTorch nn.Linear default init range
    w = jax.random.uniform(k1, (fan_in, fan_out), minval=-bound, maxval=bound,
                           dtype=jnp.float32)
    b = jax.random.uniform(k2, (1, fan_out), minval=-bound, maxval=bound,
                           dtype=jnp.float32)
    return w, b


def init_mlp(key, n):
    k0, k1, k2 = jax.random.split(key, 3)
    w0, b0 = init_linear(k0, n, H1)
    w1, b1 = init_linear(k1, H1, H2)
    w2, b2 = init_linear(k2, H2, n)
    return (w0, b0, w1, b1, w2, b2)


if __name__ == "__main__":
    # Small shapes consistent with the module: M (f, t), W (f, l), H (l, t).
    f, t, l = 16, 16, 8

    key = jax.random.PRNGKey(0)
    k_aw, k_ah, k_m, k_w, k_h = jax.random.split(key, 5)
    aw_params = init_mlp(k_aw, f * l)    # Aw: w_size = f*l
    ah_params = init_mlp(k_ah, l * t)    # Ah: h_size = l*t

    M = jax.random.uniform(k_m, (f, t), dtype=jnp.float32)           # nonnegative input
    W = jax.random.uniform(k_w, (f, l), dtype=jnp.float32) + 1e-3    # strictly positive
    H = jax.random.uniform(k_h, (l, t), dtype=jnp.float32) + 1e-3

    W_new, H_new = jax.jit(ralmu_block)(M, W, H, aw_params, ah_params)
    jax.block_until_ready((W_new, H_new))

    assert W_new.shape == (f, l) and H_new.shape == (l, t)
    assert bool(jnp.all(jnp.isfinite(W_new))) and bool(jnp.all(jnp.isfinite(H_new)))

    # Validate against the pure-JAX reference (loose rtol covers the EUP approx reciprocal).
    W_ref, H_ref = ralmu_block_ref(M, W, H, aw_params, ah_params)
    assert bool(jnp.allclose(W_new, W_ref, rtol=3e-2, atol=1e-5))
    assert bool(jnp.allclose(H_new, H_ref, rtol=3e-2, atol=1e-5))

    print("KERNEL_OK")
</pallas_src>

<mosaic_0001>
module attributes {stable_mosaic.version = 11 : i64} {
  func.func @ralmu_block_kernel(%arg0: memref<16x16xf32, #tpu.memory_space<vmem>>, %arg1: memref<16x8xf32, #tpu.memory_space<vmem>>, %arg2: memref<8x16xf32, #tpu.memory_space<vmem>>, %arg3: memref<1x256xf32, #tpu.memory_space<vmem>>, %arg4: memref<256x512xf32, #tpu.memory_space<vmem>>, %arg5: memref<1x512xf32, #tpu.memory_space<vmem>>, %arg6: memref<512x256xf32, #tpu.memory_space<vmem>>, %arg7: memref<1x256xf32, #tpu.memory_space<vmem>>, %arg8: memref<256x256xf32, #tpu.memory_space<vmem>>, %arg9: memref<1x256xf32, #tpu.memory_space<vmem>>, %arg10: memref<16x128xf32, #tpu.memory_space<vmem>>, %arg11: memref<128x8xf32, #tpu.memory_space<vmem>>, %arg12: memref<8x128xf32, #tpu.memory_space<vmem>>, %arg13: memref<128x16xf32, #tpu.memory_space<vmem>>, %arg14: memref<16x8xf32, #tpu.memory_space<vmem>>, %arg15: memref<8x16xf32, #tpu.memory_space<vmem>>) attributes {dimension_semantics = [], scalar_prefetch = 0 : i64, scratch_operands = 0 : i64, tpu.core_type = #tpu.core_type<tc>} {
    %c0 = arith.constant 0 : index
    %c0_0 = arith.constant 0 : index
    %0 = vector.load %arg0[%c0, %c0_0] : memref<16x16xf32, #tpu.memory_space<vmem>>, vector<16x16xf32>
    %c0_1 = arith.constant 0 : index
    %c0_2 = arith.constant 0 : index
    %1 = vector.load %arg1[%c0_1, %c0_2] : memref<16x8xf32, #tpu.memory_space<vmem>>, vector<16x8xf32>
    %c0_3 = arith.constant 0 : index
    %c0_4 = arith.constant 0 : index
    %2 = vector.load %arg2[%c0_3, %c0_4] : memref<8x16xf32, #tpu.memory_space<vmem>>, vector<8x16xf32>
    %c0_5 = arith.constant 0 : index
    %c0_6 = arith.constant 0 : index
    %3 = vector.load %arg3[%c0_5, %c0_6] : memref<1x256xf32, #tpu.memory_space<vmem>>, vector<1x256xf32>
    %c0_7 = arith.constant 0 : index
    %c0_8 = arith.constant 0 : index
    %4 = vector.load %arg4[%c0_7, %c0_8] : memref<256x512xf32, #tpu.memory_space<vmem>>, vector<256x512xf32>
    %cst = arith.constant dense<0.000000e+00> : vector<1x512xf32>
    %5 = tpu.matmul %3, %4, %cst {dimension_numbers = #tpu.dot_dimension_numbers<[1], [0], [0], [1], [0, 0, 1, 1], [], []>} : vector<1x256xf32>, vector<256x512xf32>, vector<1x512xf32> -> vector<1x512xf32>
    %c0_9 = arith.constant 0 : index
    %c0_10 = arith.constant 0 : index
    %6 = vector.load %arg5[%c0_9, %c0_10] : memref<1x512xf32, #tpu.memory_space<vmem>>, vector<1x512xf32>
    %7 = arith.addf %5, %6 : vector<1x512xf32>
    %cst_11 = arith.constant 0.000000e+00 : f32
    %8 = vector.broadcast %cst_11 : f32 to vector<1x512xf32>
    %9 = arith.maximumf %7, %8 : vector<1x512xf32>
    %c0_12 = arith.constant 0 : index
    %c0_13 = arith.constant 0 : index
    %10 = vector.load %arg6[%c0_12, %c0_13] : memref<512x256xf32, #tpu.memory_space<vmem>>, vector<512x256xf32>
    %cst_14 = arith.constant dense<0.000000e+00> : vector<1x256xf32>
    %11 = tpu.matmul %9, %10, %cst_14 {dimension_numbers = #tpu.dot_dimension_numbers<[1], [0], [0], [1], [0, 0, 1, 1], [], []>} : vector<1x512xf32>, vector<512x256xf32>, vector<1x256xf32> -> vector<1x256xf32>
    %c0_15 = arith.constant 0 : index
    %c0_16 = arith.constant 0 : index
    %12 = vector.load %arg7[%c0_15, %c0_16] : memref<1x256xf32, #tpu.memory_space<vmem>>, vector<1x256xf32>
    %13 = arith.addf %11, %12 : vector<1x256xf32>
    %cst_17 = arith.constant 0.000000e+00 : f32
    %14 = vector.broadcast %cst_17 : f32 to vector<1x256xf32>
    %15 = arith.maximumf %13, %14 : vector<1x256xf32>
    %c0_18 = arith.constant 0 : index
    %c0_19 = arith.constant 0 : index
    %16 = vector.load %arg8[%c0_18, %c0_19] : memref<256x256xf32, #tpu.memory_space<vmem>>, vector<256x256xf32>
    %cst_20 = arith.constant dense<0.000000e+00> : vector<1x256xf32>
    %17 = tpu.matmul %15, %16, %cst_20 {dimension_numbers = #tpu.dot_dimension_numbers<[1], [0], [0], [1], [0, 0, 1, 1], [], []>} : vector<1x256xf32>, vector<256x256xf32>, vector<1x256xf32> -> vector<1x256xf32>
    %c0_21 = arith.constant 0 : index
    %c0_22 = arith.constant 0 : index
    %18 = vector.load %arg9[%c0_21, %c0_22] : memref<1x256xf32, #tpu.memory_space<vmem>>, vector<1x256xf32>
    %19 = arith.addf %17, %18 : vector<1x256xf32>
    %cst_23 = arith.constant 0.000000e+00 : f32
    %20 = vector.broadcast %cst_23 : f32 to vector<1x256xf32>
    %21 = arith.maximumf %19, %20 : vector<1x256xf32>
    %22 = vector.extract_strided_slice %21 {offsets = [0, 0], sizes = [1, 128], strides = [1, 1]} : vector<1x256xf32> to vector<1x128xf32>
    %23 = vector.extract_strided_slice %21 {offsets = [0, 128], sizes = [1, 128], strides = [1, 1]} : vector<1x256xf32> to vector<1x128xf32>
    %24 = vector.shape_cast %22 : vector<1x128xf32> to vector<1x128xf32>
    %25 = vector.broadcast %24 : vector<1x128xf32> to vector<16x128xf32>
    %c0_24 = arith.constant 0 : index
    %c0_25 = arith.constant 0 : index
    %26 = vector.load %arg10[%c0_24, %c0_25] : memref<16x128xf32, #tpu.memory_space<vmem>>, vector<16x128xf32>
    %27 = arith.mulf %25, %26 : vector<16x128xf32>
    %c0_26 = arith.constant 0 : index
    %c0_27 = arith.constant 0 : index
    %28 = vector.load %arg11[%c0_26, %c0_27] : memref<128x8xf32, #tpu.memory_space<vmem>>, vector<128x8xf32>
    %cst_28 = arith.constant dense<0.000000e+00> : vector<16x8xf32>
    %29 = tpu.matmul %27, %28, %cst_28 {dimension_numbers = #tpu.dot_dimension_numbers<[1], [0], [0], [1], [0, 0, 1, 1], [], []>} : vector<16x128xf32>, vector<128x8xf32>, vector<16x8xf32> -> vector<16x8xf32>
    %30 = vector.shape_cast %23 : vector<1x128xf32> to vector<1x128xf32>
    %31 = vector.broadcast %30 : vector<1x128xf32> to vector<8x128xf32>
    %c0_29 = arith.constant 0 : index
    %c0_30 = arith.constant 0 : index
    %32 = vector.load %arg12[%c0_29, %c0_30] : memref<8x128xf32, #tpu.memory_space<vmem>>, vector<8x128xf32>
    %33 = arith.mulf %31, %32 : vector<8x128xf32>
    %c0_31 = arith.constant 0 : index
    %c0_32 = arith.constant 0 : index
    %34 = vector.load %arg13[%c0_31, %c0_32] : memref<128x16xf32, #tpu.memory_space<vmem>>, vector<128x16xf32>
    %cst_33 = arith.constant dense<0.000000e+00> : vector<8x16xf32>
    %35 = tpu.matmul %33, %34, %cst_33 {dimension_numbers = #tpu.dot_dimension_numbers<[1], [0], [0], [1], [0, 0, 1, 1], [], []>} : vector<8x128xf32>, vector<128x16xf32>, vector<8x16xf32> -> vector<8x16xf32>
    %cst_34 = arith.constant dense<0.000000e+00> : vector<16x8xf32>
    %36 = tpu.matmul %0, %2, %cst_34 {dimension_numbers = #tpu.dot_dimension_numbers<[1], [1], [0], [0], [0, 0, 1, 0], [], []>} : vector<16x16xf32>, vector<8x16xf32>, vector<16x8xf32> -> vector<16x8xf32>
    %cst_35 = arith.constant dense<0.000000e+00> : vector<8x8xf32>
    %37 = tpu.matmul %2, %2, %cst_35 {dimension_numbers = #tpu.dot_dimension_numbers<[1], [1], [0], [0], [0, 0, 1, 0], [], []>} : vector<8x16xf32>, vector<8x16xf32>, vector<8x8xf32> -> vector<8x8xf32>
    %cst_36 = arith.constant dense<0.000000e+00> : vector<16x8xf32>
    %38 = tpu.matmul %1, %37, %cst_36 {dimension_numbers = #tpu.dot_dimension_numbers<[1], [0], [0], [1], [0, 0, 1, 1], [], []>} : vector<16x8xf32>, vector<8x8xf32>, vector<16x8xf32> -> vector<16x8xf32>
    %cst_37 = arith.constant 9.99999974E-5 : f32
    %39 = vector.broadcast %cst_37 : f32 to vector<16x8xf32>
    %40 = arith.addf %38, %39 : vector<16x8xf32>
    %41 = arith.mulf %1, %29 : vector<16x8xf32>
    %42 = arith.mulf %41, %36 : vector<16x8xf32>
    %43 = tpu.reciprocal %40 {approx = true} : vector<16x8xf32> -> vector<16x8xf32>
    %44 = arith.mulf %42, %43 : vector<16x8xf32>
    %c0_38 = arith.constant 0 : index
    %c0_39 = arith.constant 0 : index
    %45 = vector.load %arg14[%c0_38, %c0_39] : memref<16x8xf32, #tpu.memory_space<vmem>>, vector<16x8xf32>
    tpu.vector_store %arg14[%c0_38, %c0_39], %44 {strides = array<i32>} : memref<16x8xf32, #tpu.memory_space<vmem>>, vector<16x8xf32>,
    %cst_40 = arith.constant dense<0.000000e+00> : vector<8x16xf32>
    %46 = tpu.matmul %44, %0, %cst_40 {dimension_numbers = #tpu.dot_dimension_numbers<[0], [0], [1], [1], [0, 1, 1, 1], [], []>} : vector<16x8xf32>, vector<16x16xf32>, vector<8x16xf32> -> vector<8x16xf32>
    %cst_41 = arith.constant dense<0.000000e+00> : vector<8x8xf32>
    %47 = tpu.matmul %44, %44, %cst_41 {dimension_numbers = #tpu.dot_dimension_numbers<[0], [0], [1], [1], [0, 1, 1, 1], [], []>} : vector<16x8xf32>, vector<16x8xf32>, vector<8x8xf32> -> vector<8x8xf32>
    %cst_42 = arith.constant dense<0.000000e+00> : vector<8x16xf32>
    %48 = tpu.matmul %47, %2, %cst_42 {dimension_numbers = #tpu.dot_dimension_numbers<[1], [0], [0], [1], [0, 0, 1, 1], [], []>} : vector<8x8xf32>, vector<8x16xf32>, vector<8x16xf32> -> vector<8x16xf32>
    %cst_43 = arith.constant 9.99999974E-5 : f32
    %49 = vector.broadcast %cst_43 : f32 to vector<8x16xf32>
    %50 = arith.addf %48, %49 : vector<8x16xf32>
    %51 = arith.mulf %2, %35 : vector<8x16xf32>
    %52 = arith.mulf %51, %46 : vector<8x16xf32>
    %53 = tpu.reciprocal %50 {approx = true} : vector<8x16xf32> -> vector<8x16xf32>
    %54 = arith.mulf %52, %53 : vector<8x16xf32>
    %c0_44 = arith.constant 0 : index
    %c0_45 = arith.constant 0 : index
    %55 = vector.load %arg15[%c0_44, %c0_45] : memref<8x16xf32, #tpu.memory_space<vmem>>, vector<8x16xf32>
    tpu.vector_store %arg15[%c0_44, %c0_45], %54 {strides = array<i32>} : memref<8x16xf32, #tpu.memory_space<vmem>>, vector<8x16xf32>,
    return
  }
}

</mosaic_0001>

<llo_original>
// kernel: ralmu_block.1
$region0: #{ralmu_block.1}
  #allocation0 [shape = 'u32[]', space=smem, size = 0x4, offset = 0x4, fixed_abs, tag = 'smem constant byte address 0x4 - core index']
  #allocation1 [shape = 'u32[144,128]{1,0:T(1,128)}', space=vmem, size = 0x12000, scoped, tag = 'internal scratch']
  %s0 = inlined_call_operand.vmem [shape: f32[16,16], index: 0, kind: input, shape index: {}]
  %s1 = inlined_call_operand.vmem [shape: f32[16,8], index: 1, kind: input, shape index: {}]
  %s2 = inlined_call_operand.vmem [shape: f32[8,16], index: 2, kind: input, shape index: {}]
  %s3 = inlined_call_operand.vmem [shape: f32[1,256], index: 3, kind: input, shape index: {}]
  %s4 = inlined_call_operand.vmem [shape: f32[256,512], index: 4, kind: input, shape index: {}]
  %s5 = inlined_call_operand.vmem [shape: f32[1,512], index: 5, kind: input, shape index: {}]
  %s6 = inlined_call_operand.vmem [shape: f32[512,256], index: 6, kind: input, shape index: {}]
  %s7 = inlined_call_operand.vmem [shape: f32[1,256], index: 7, kind: input, shape index: {}]
  %s8 = inlined_call_operand.vmem [shape: f32[256,256], index: 8, kind: input, shape index: {}]
  %s9 = inlined_call_operand.vmem [shape: f32[1,256], index: 9, kind: input, shape index: {}]
  %s10 = inlined_call_operand.vmem [shape: f32[16,128], index: 10, kind: input, shape index: {}]
  %s11 = inlined_call_operand.vmem [shape: f32[128,8], index: 11, kind: input, shape index: {}]
  %s12 = inlined_call_operand.vmem [shape: f32[8,128], index: 12, kind: input, shape index: {}]
  %s13 = inlined_call_operand.vmem [shape: f32[128,16], index: 13, kind: input, shape index: {}]
  %s14 = inlined_call_operand.vmem [shape: f32[16,8], index: 14, kind: output, shape index: {0}]
  %s15 = inlined_call_operand.hbm [shape: f32[8,16], index: 15, kind: output, shape index: {1}]
  %16 = xla_tuple %s14, %s15
  %s17 = sld [smem:[#allocation0]]
  $region74: #{ralmu_block.1} parent=0
    _
  %s19 = ssub.s32 1, %s17
  %s20 = scalar_select 0, %s19, %s17
  $region1: #{ralmu_block.1} parent=0
    #allocation2 [shape = 'u8[4096]{0}', space=vmem, size = 0x1000, scoped, tag = 'output window, operand 1, single buffered']
    #allocation3 [shape = 's32[1]{0}', space=sflag, size = 0x4, scoped, tag = 'scoped memory for ralmu_block.1']
    %21 = vsyncpa [#allocation3], 0
    // Predicated region
    $region2: #{ralmu_block.1} parent=1 // pred_check
      _
    $region3: #{ralmu_block.1} parent=1 // pred_check_branch
      %23 = sbr.rel (0) target = $region5
    $region4: #{ralmu_block.1} parent=1 // pred_region
      _
    $region5: #{ralmu_block.1} parent=1 // pred_fallthru
      _
    // Predicated region
    $region6: #{ralmu_block.1} parent=1 // pred_check
      _
    $region7: #{ralmu_block.1} parent=1 // pred_check_branch
      %25 = sbr.rel (0) target = $region9
    $region8: #{ralmu_block.1} parent=1 // pred_region
      _
    $region9: #{ralmu_block.1} parent=1 // pred_fallthru
      _
    // Predicated region
    $region10: #{ralmu_block.1} parent=1 // pred_check
      _
    $region11: #{ralmu_block.1} parent=1 // pred_check_branch
      %27 = sbr.rel (0) target = $region13
    $region12: #{ralmu_block.1} parent=1 // pred_region
      _
    $region13: #{ralmu_block.1} parent=1 // pred_fallthru
      _
    // Predicated region
    $region14: #{ralmu_block.1} parent=1 // pred_check
      _
    $region15: #{ralmu_block.1} parent=1 // pred_check_branch
      %29 = sbr.rel (0) target = $region17
    $region16: #{ralmu_block.1} parent=1 // pred_region
      _
    $region17: #{ralmu_block.1} parent=1 // pred_fallthru
      _
    // Predicated region
    $region18: #{ralmu_block.1} parent=1 // pred_check
      _
    $region19: #{ralmu_block.1} parent=1 // pred_check_branch
      %31 = sbr.rel (0) target = $region21
    $region20: #{ralmu_block.1} parent=1 // pred_region
      _
    $region21: #{ralmu_block.1} parent=1 // pred_fallthru
      _
    // Predicated region
    $region22: #{ralmu_block.1} parent=1 // pred_check
      _
    $region23: #{ralmu_block.1} parent=1 // pred_check_branch
      %33 = sbr.rel (0) target = $region25
    $region24: #{ralmu_block.1} parent=1 // pred_region
      _
    $region25: #{ralmu_block.1} parent=1 // pred_fallthru
      _
    // Predicated region
    $region26: #{ralmu_block.1} parent=1 // pred_check
      _
    $region27: #{ralmu_block.1} parent=1 // pred_check_branch
      %35 = sbr.rel (0) target = $region29
    $region28: #{ralmu_block.1} parent=1 // pred_region
      _
    $region29: #{ralmu_block.1} parent=1 // pred_fallthru
      _
    // Predicated region
    $region30: #{ralmu_block.1} parent=1 // pred_check
      _
    $region31: #{ralmu_block.1} parent=1 // pred_check_branch
      %37 = sbr.rel (0) target = $region33
    $region32: #{ralmu_block.1} parent=1 // pred_region
      _
    $region33: #{ralmu_block.1} parent=1 // pred_fallthru
      _
    // Predicated region
    $region34: #{ralmu_block.1} parent=1 // pred_check
      _
    $region35: #{ralmu_block.1} parent=1 // pred_check_branch
      %39 = sbr.rel (0) target = $region37
    $region36: #{ralmu_block.1} parent=1 // pred_region
      _
    $region37: #{ralmu_block.1} parent=1 // pred_fallthru
      _
    // Predicated region
    $region38: #{ralmu_block.1} parent=1 // pred_check
      _
    $region39: #{ralmu_block.1} parent=1 // pred_check_branch
      %41 = sbr.rel (0) target = $region41
    $region40: #{ralmu_block.1} parent=1 // pred_region
      _
    $region41: #{ralmu_block.1} parent=1 // pred_fallthru
      _
    // Predicated region
    $region42: #{ralmu_block.1} parent=1 // pred_check
      _
    $region43: #{ralmu_block.1} parent=1 // pred_check_branch
      %43 = sbr.rel (0) target = $region45
    $region44: #{ralmu_block.1} parent=1 // pred_region
      _
    $region45: #{ralmu_block.1} parent=1 // pred_fallthru
      _
    // Predicated region
    $region46: #{ralmu_block.1} parent=1 // pred_check
      _
    $region47: #{ralmu_block.1} parent=1 // pred_check_branch
      %45 = sbr.rel (0) target = $region49
    $region48: #{ralmu_block.1} parent=1 // pred_region
      _
    $region49: #{ralmu_block.1} parent=1 // pred_fallthru
      _
    // Predicated region
    $region50: #{ralmu_block.1} parent=1 // pred_check
      _
    $region51: #{ralmu_block.1} parent=1 // pred_check_branch
      %47 = sbr.rel (0) target = $region53
    $region52: #{ralmu_block.1} parent=1 // pred_region
      _
    $region53: #{ralmu_block.1} parent=1 // pred_fallthru
      _
    // Predicated region
    $region54: #{ralmu_block.1} parent=1 // pred_check
      _
    $region55: #{ralmu_block.1} parent=1 // pred_check_branch
      %49 = sbr.rel (0) target = $region57
    $region56: #{ralmu_block.1} parent=1 // pred_region
      _
    $region57: #{ralmu_block.1} parent=1 // pred_fallthru
      _
    %v50 = vld [vmem:[%s0] sm:$0xff]
    %v51 = vld [vmem:[%s0 + $0x8] sm:$0xff]
    %v52 = vld [vmem:[%s1] sm:$0xff]
    %v53 = vld [vmem:[%s1 + $0x8] sm:$0xff]
    %v54 = vld [vmem:[%s2] sm:$0xff]
    %v55 = vld [vmem:[%s3] sm:$0x3]
    %v56 = vld [vmem:[%s4] sm:$0xff]
    %v57 = vld [vmem:[%s4 + $0x8] sm:$0xff]
    %v58 = vld [vmem:[%s4 + $0x10] sm:$0xff]
    %v59 = vld [vmem:[%s4 + $0x18] sm:$0xff]
    %v60 = vld [vmem:[%s4 + $0x20] sm:$0xff]
    %v61 = vld [vmem:[%s4 + $0x28] sm:$0xff]
    %v62 = vld [vmem:[%s4 + $0x30] sm:$0xff]
    %v63 = vld [vmem:[%s4 + $0x38] sm:$0xff]
    %v64 = vld [vmem:[%s4 + $0x40] sm:$0xff]
    %v65 = vld [vmem:[%s4 + $0x48] sm:$0xff]
    %v66 = vld [vmem:[%s4 + $0x50] sm:$0xff]
    %v67 = vld [vmem:[%s4 + $0x58] sm:$0xff]
    %v68 = vld [vmem:[%s4 + $0x60] sm:$0xff]
    %v69 = vld [vmem:[%s4 + $0x68] sm:$0xff]
    %v70 = vld [vmem:[%s4 + $0x70] sm:$0xff]
    %v71 = vld [vmem:[%s4 + $0x78] sm:$0xff]
    %v72 = vld [vmem:[%s4 + $0x80] sm:$0xff]
    %v73 = vld [vmem:[%s4 + $0x88] sm:$0xff]
    %v74 = vld [vmem:[%s4 + $0x90] sm:$0xff]
    %v75 = vld [vmem:[%s4 + $0x98] sm:$0xff]
    %v76 = vld [vmem:[%s4 + $0xa0] sm:$0xff]
    %v77 = vld [vmem:[%s4 + $0xa8] sm:$0xff]
    %v78 = vld [vmem:[%s4 + $0xb0] sm:$0xff]
    %v79 = vld [vmem:[%s4 + $0xb8] sm:$0xff]
    %v80 = vld [vmem:[%s4 + $0xc0] sm:$0xff]
    %v81 = vld [vmem:[%s4 + $0xc8] sm:$0xff]
    %v82 = vld [vmem:[%s4 + $0xd0] sm:$0xff]
    %v83 = vld [vmem:[%s4 + $0xd8] sm:$0xff]
    %v84 = vld [vmem:[%s4 + $0xe0] sm:$0xff]
    %v85 = vld [vmem:[%s4 + $0xe8] sm:$0xff]
    %v86 = vld [vmem:[%s4 + $0xf0] sm:$0xff]
    %v87 = vld [vmem:[%s4 + $0xf8] sm:$0xff]
    %v88 = vld [vmem:[%s4 + $0x100] sm:$0xff]
    %v89 = vld [vmem:[%s4 + $0x108] sm:$0xff]
    %v90 = vld [vmem:[%s4 + $0x110] sm:$0xff]
    %v91 = vld [vmem:[%s4 + $0x118] sm:$0xff]
    %v92 = vld [vmem:[%s4 + $0x120] sm:$0xff]
    %v93 = vld [vmem:[%s4 + $0x128] sm:$0xff]
    %v94 = vld [vmem:[%s4 + $0x130] sm:$0xff]
    %v95 = vld [vmem:[%s4 + $0x138] sm:$0xff]
    %v96 = vld [vmem:[%s4 + $0x140] sm:$0xff]
    %v97 = vld [vmem:[%s4 + $0x148] sm:$0xff]
    %v98 = vld [vmem:[%s4 + $0x150] sm:$0xff]
    %v99 = vld [vmem:[%s4 + $0x158] sm:$0xff]
    %v100 = vld [vmem:[%s4 + $0x160] sm:$0xff]
    %v101 = vld [vmem:[%s4 + $0x168] sm:$0xff]
    %v102 = vld [vmem:[%s4 + $0x170] sm:$0xff]
    %v103 = vld [vmem:[%s4 + $0x178] sm:$0xff]
    %v104 = vld [vmem:[%s4 + $0x180] sm:$0xff]
    %v105 = vld [vmem:[%s4 + $0x188] sm:$0xff]
    %v106 = vld [vmem:[%s4 + $0x190] sm:$0xff]
    %v107 = vld [vmem:[%s4 + $0x198] sm:$0xff]
    %v108 = vld [vmem:[%s4 + $0x1a0] sm:$0xff]
    %v109 = vld [vmem:[%s4 + $0x1a8] sm:$0xff]
    %v110 = vld [vmem:[%s4 + $0x1b0] sm:$0xff]
    %v111 = vld [vmem:[%s4 + $0x1b8] sm:$0xff]
    %v112 = vld [vmem:[%s4 + $0x1c0] sm:$0xff]
    %v113 = vld [vmem:[%s4 + $0x1c8] sm:$0xff]
    %v114 = vld [vmem:[%s4 + $0x1d0] sm:$0xff]
    %v115 = vld [vmem:[%s4 + $0x1d8] sm:$0xff]
    %v116 = vld [vmem:[%s4 + $0x1e0] sm:$0xff]
    %v117 = vld [vmem:[%s4 + $0x1e8] sm:$0xff]
    %v118 = vld [vmem:[%s4 + $0x1f0] sm:$0xff]
    %v119 = vld [vmem:[%s4 + $0x1f8] sm:$0xff]
    %v120 = vld [vmem:[%s4 + $0x200] sm:$0xff]
    %v121 = vld [vmem:[%s4 + $0x208] sm:$0xff]
    %v122 = vld [vmem:[%s4 + $0x210] sm:$0xff]
    %v123 = vld [vmem:[%s4 + $0x218] sm:$0xff]
    %v124 = vld [vmem:[%s4 + $0x220] sm:$0xff]
    %v125 = vld [vmem:[%s4 + $0x228] sm:$0xff]
    %v126 = vld [vmem:[%s4 + $0x230] sm:$0xff]
    %v127 = vld [vmem:[%s4 + $0x238] sm:$0xff]
    %v128 = vld [vmem:[%s4 + $0x240] sm:$0xff]
    %v129 = vld [vmem:[%s4 + $0x248] sm:$0xff]
    %v130 = vld [vmem:[%s4 + $0x250] sm:$0xff]
    %v131 = vld [vmem:[%s4 + $0x258] sm:$0xff]
    %v132 = vld [vmem:[%s4 + $0x260] sm:$0xff]
    %v133 = vld [vmem:[%s4 + $0x268] sm:$0xff]
    %v134 = vld [vmem:[%s4 + $0x270] sm:$0xff]
    %v135 = vld [vmem:[%s4 + $0x278] sm:$0xff]
    %v136 = vld [vmem:[%s4 + $0x280] sm:$0xff]
    %v137 = vld [vmem:[%s4 + $0x288] sm:$0xff]
    %v138 = vld [vmem:[%s4 + $0x290] sm:$0xff]
    %v139 = vld [vmem:[%s4 + $0x298] sm:$0xff]
    %v140 = vld [vmem:[%s4 + $0x2a0] sm:$0xff]
    %v141 = vld [vmem:[%s4 + $0x2a8] sm:$0xff]
    %v142 = vld [vmem:[%s4 + $0x2b0] sm:$0xff]
    %v143 = vld [vmem:[%s4 + $0x2b8] sm:$0xff]
    %v144 = vld [vmem:[%s4 + $0x2c0] sm:$0xff]
    %v145 = vld [vmem:[%s4 + $0x2c8] sm:$0xff]
    %v146 = vld [vmem:[%s4 + $0x2d0] sm:$0xff]
    %v147 = vld [vmem:[%s4 + $0x2d8] sm:$0xff]
    %v148 = vld [vmem:[%s4 + $0x2e0] sm:$0xff]
    %v149 = vld [vmem:[%s4 + $0x2e8] sm:$0xff]
    %v150 = vld [vmem:[%s4 + $0x2f0] sm:$0xff]
    %v151 = vld [vmem:[%s4 + $0x2f8] sm:$0xff]
    %v152 = vld [vmem:[%s4 + $0x300] sm:$0xff]
    %v153 = vld [vmem:[%s4 + $0x308] sm:$0xff]
    %v154 = vld [vmem:[%s4 + $0x310] sm:$0xff]
    %v155 = vld [vmem:[%s4 + $0x318] sm:$0xff]
    %v156 = vld [vmem:[%s4 + $0x320] sm:$0xff]
    %v157 = vld [vmem:[%s4 + $0x328] sm:$0xff]
    %v158 = vld [vmem:[%s4 + $0x330] sm:$0xff]
    %v159 = vld [vmem:[%s4 + $0x338] sm:$0xff]
    %v160 = vld [vmem:[%s4 + $0x340] sm:$0xff]
    %v161 = vld [vmem:[%s4 + $0x348] sm:$0xff]
    %v162 = vld [vmem:[%s4 + $0x350] sm:$0xff]
    %v163 = vld [vmem:[%s4 + $0x358] sm:$0xff]
    %v164 = vld [vmem:[%s4 + $0x360] sm:$0xff]
    %v165 = vld [vmem:[%s4 + $0x368] sm:$0xff]
    %v166 = vld [vmem:[%s4 + $0x370] sm:$0xff]
    %v167 = vld [vmem:[%s4 + $0x378] sm:$0xff]
    %v168 = vld [vmem:[%s4 + $0x380] sm:$0xff]
    %v169 = vld [vmem:[%s4 + $0x388] sm:$0xff]
    %v170 = vld [vmem:[%s4 + $0x390] sm:$0xff]
    %v171 = vld [vmem:[%s4 + $0x398] sm:$0xff]
    %v172 = vld [vmem:[%s4 + $0x3a0] sm:$0xff]
    %v173 = vld [vmem:[%s4 + $0x3a8] sm:$0xff]
    %v174 = vld [vmem:[%s4 + $0x3b0] sm:$0xff]
    %v175 = vld [vmem:[%s4 + $0x3b8] sm:$0xff]
    %v176 = vld [vmem:[%s4 + $0x3c0] sm:$0xff]
    %v177 = vld [vmem:[%s4 + $0x3c8] sm:$0xff]
    %v178 = vld [vmem:[%s4 + $0x3d0] sm:$0xff]
    %v179 = vld [vmem:[%s4 + $0x3d8] sm:$0xff]
    %v180 = vld [vmem:[%s4 + $0x3e0] sm:$0xff]
    %v181 = vld [vmem:[%s4 + $0x3e8] sm:$0xff]
    %v182 = vld [vmem:[%s4 + $0x3f0] sm:$0xff]
    %v183 = vld [vmem:[%s4 + $0x3f8] sm:$0xff]
    %v184 = vld [vmem:[%s5] sm:$0xf]
    %v186 = vlaneseq
    %v187 = vshrl.u32 %v186, 7
    %v188 = vsub.s32 0, %v187
    %v189 = vrot.slane %v55, %v188
    %v190 = vlaneseq
    %v191 = vshrl.u32 %v190, 7
    %v192 = vsub.s32 1, %v191
    %v193 = vrot.slane %v55, %v192
    %v197 = vlaneseq
    %v198 = vshrl.u32 %v197, 7
    %v199 = vsub.s32 0, %v198
    %v200 = vrot.slane %v184, %v199
    %v201 = vlaneseq
    %v202 = vshrl.u32 %v201, 7
    %v203 = vsub.s32 1, %v202
    %v204 = vrot.slane %v184, %v203
    %v205 = vlaneseq
    %v206 = vshrl.u32 %v205, 7
    %v207 = vsub.s32 2, %v206
    %v208 = vrot.slane %v184, %v207
    %v209 = vlaneseq
    %v210 = vshrl.u32 %v209, 7
    %v211 = vsub.s32 3, %v210
    %v212 = vrot.slane %v184, %v211
    %217 = vmatprep.subr.mxu0 %v117
    %218 = vmatpush1.msra.mxu0 %v116
    %219 = vmatprep.subr.mxu0 %v113
    %220 = vmatpush1.msra.mxu0 %v112
    %221 = vmatprep.subr.mxu0 %v109
    %222 = vmatpush1.msra.mxu0 %v108
    %223 = vmatprep.subr.mxu0 %v105
    %224 = vmatpush1.msra.mxu0 %v104
    %225 = vmatprep.subr.mxu0 %v101
    %226 = vmatpush1.msra.mxu0 %v100
    %227 = vmatprep.subr.mxu0 %v97
    %228 = vmatpush1.msra.mxu0 %v96
    %229 = vmatprep.subr.mxu0 %v93
    %230 = vmatpush1.msra.mxu0 %v92
    %231 = vmatprep.subr.mxu0 %v89
    %232 = vmatpush1.msra.mxu0 %v88
    %233 = vmatprep.subr.mxu0 %v85
    %234 = vmatpush1.msra.mxu0 %v84
    %235 = vmatprep.subr.mxu0 %v81
    %236 = vmatpush1.msra.mxu0 %v80
    %237 = vmatprep.subr.mxu0 %v77
    %238 = vmatpush1.msra.mxu0 %v76
    %239 = vmatprep.subr.mxu0 %v73
    %240 = vmatpush1.msra.mxu0 %v72
    %241 = vmatprep.subr.mxu0 %v69
    %242 = vmatpush1.msra.mxu0 %v68
    %243 = vmatprep.subr.mxu0 %v65
    %244 = vmatpush1.msra.mxu0 %v64
    %245 = vmatprep.subr.mxu0 %v61
    %246 = vmatpush1.msra.mxu0 %v60
    %247 = vmatprep.subr.mxu0 %v57
    %248 = vmatpush1.msra.mxu0 %v56
    %249 = vmatprep.subr.mxu0 %v181
    %250 = vmatpush2.msra.mxu0 %v180
    %251 = vmatprep.subr.mxu0 %v177
    %252 = vmatpush2.msra.mxu0 %v176
    %253 = vmatprep.subr.mxu0 %v173
    %254 = vmatpush2.msra.mxu0 %v172
    %255 = vmatprep.subr.mxu0 %v169
    %256 = vmatpush2.msra.mxu0 %v168
    %257 = vmatprep.subr.mxu0 %v165
    %258 = vmatpush2.msra.mxu0 %v164
    %259 = vmatprep.subr.mxu0 %v161
    %260 = vmatpush2.msra.mxu0 %v160
    %261 = vmatprep.subr.mxu0 %v157
    %262 = vmatpush2.msra.mxu0 %v156
    %263 = vmatprep.subr.mxu0 %v153
    %264 = vmatpush2.msra.mxu0 %v152
    %265 = vmatprep.subr.mxu0 %v149
    %266 = vmatpush2.msra.mxu0 %v148
    %267 = vmatprep.subr.mxu0 %v145
    %268 = vmatpush2.msra.mxu0 %v144
    %269 = vmatprep.subr.mxu0 %v141
    %270 = vmatpush2.msra.mxu0 %v140
    %271 = vmatprep.subr.mxu0 %v137
    %272 = vmatpush2.msra.mxu0 %v136
    %273 = vmatprep.subr.mxu0 %v133
    %274 = vmatpush2.msra.mxu0 %v132
    %275 = vmatprep.subr.mxu0 %v129
    %276 = vmatpush2.msra.mxu0 %v128
    %277 = vmatprep.subr.mxu0 %v125
    %278 = vmatpush2.msra.mxu0 %v124
    %279 = vmatprep.subr.mxu0 %v121
    %280 = vmatpush2.msra.mxu0 %v120
    %281 = vmatprep.mubr.f32.mxu0 %v193
    %282 = vmatmul.mubr.f32.gmra.mxu0 %v189
    %v283 = vpop.f32.mrf.mxu0
    %v284 = vadd.f32 %v200, %v283
    %v285 = vpop.f32.mrf.mxu0
    %v286 = vadd.f32 %v204, %v285
    %287 = vdwg.mxu0
    %288 = vmatprep.subr.mxu0 %v119
    %289 = vmatpush1.msra.mxu0 %v118
    %290 = vmatprep.subr.mxu0 %v115
    %291 = vmatpush1.msra.mxu0 %v114
    %292 = vmatprep.subr.mxu0 %v111
    %293 = vmatpush1.msra.mxu0 %v110
    %294 = vmatprep.subr.mxu0 %v107
    %295 = vmatpush1.msra.mxu0 %v106
    %296 = vmatprep.subr.mxu0 %v103
    %297 = vmatpush1.msra.mxu0 %v102
    %298 = vmatprep.subr.mxu0 %v99
    %299 = vmatpush1.msra.mxu0 %v98
    %300 = vmatprep.subr.mxu0 %v95
    %301 = vmatpush1.msra.mxu0 %v94
    %302 = vmatprep.subr.mxu0 %v91
    %303 = vmatpush1.msra.mxu0 %v90
    %304 = vmatprep.subr.mxu0 %v87
    %305 = vmatpush1.msra.mxu0 %v86
    %306 = vmatprep.subr.mxu0 %v83
    %307 = vmatpush1.msra.mxu0 %v82
    %308 = vmatprep.subr.mxu0 %v79
    %309 = vmatpush1.msra.mxu0 %v78
    %310 = vmatprep.subr.mxu0 %v75
    %311 = vmatpush1.msra.mxu0 %v74
    %312 = vmatprep.subr.mxu0 %v71
    %313 = vmatpush1.msra.mxu0 %v70
    %314 = vmatprep.subr.mxu0 %v67
    %315 = vmatpush1.msra.mxu0 %v66
    %316 = vmatprep.subr.mxu0 %v63
    %317 = vmatpush1.msra.mxu0 %v62
    %318 = vmatprep.subr.mxu0 %v59
    %319 = vmatpush1.msra.mxu0 %v58
    %320 = vmatprep.subr.mxu0 %v183
    %321 = vmatpush2.msra.mxu0 %v182
    %322 = vmatprep.subr.mxu0 %v179
    %323 = vmatpush2.msra.mxu0 %v178
    %324 = vmatprep.subr.mxu0 %v175
    %325 = vmatpush2.msra.mxu0 %v174
    %326 = vmatprep.subr.mxu0 %v171
    %327 = vmatpush2.msra.mxu0 %v170
    %328 = vmatprep.subr.mxu0 %v167
    %329 = vmatpush2.msra.mxu0 %v166
    %330 = vmatprep.subr.mxu0 %v163
    %331 = vmatpush2.msra.mxu0 %v162
    %332 = vmatprep.subr.mxu0 %v159
    %333 = vmatpush2.msra.mxu0 %v158
    %334 = vmatprep.subr.mxu0 %v155
    %335 = vmatpush2.msra.mxu0 %v154
    %336 = vmatprep.subr.mxu0 %v151
    %337 = vmatpush2.msra.mxu0 %v150
    %338 = vmatprep.subr.mxu0 %v147
    %339 = vmatpush2.msra.mxu0 %v146
    %340 = vmatprep.subr.mxu0 %v143
    %341 = vmatpush2.msra.mxu0 %v142
    %342 = vmatprep.subr.mxu0 %v139
    %343 = vmatpush2.msra.mxu0 %v138
    %344 = vmatprep.subr.mxu0 %v135
    %345 = vmatpush2.msra.mxu0 %v134
    %346 = vmatprep.subr.mxu0 %v131
    %347 = vmatpush2.msra.mxu0 %v130
    %348 = vmatprep.subr.mxu0 %v127
    %349 = vmatpush2.msra.mxu0 %v126
    %350 = vmatprep.subr.mxu0 %v123
    %351 = vmatpush2.msra.mxu0 %v122
    %352 = vmatprep.mubr.f32.mxu0 %v193
    %353 = vmatmul.mubr.f32.gmra.mxu0 %v189
    %v354 = vpop.f32.mrf.mxu0
    %v355 = vadd.f32 %v208, %v354
    %v356 = vpop.f32.mrf.mxu0
    %v357 = vadd.f32 %v212, %v356
    %358 = vdwg.mxu0
    %v359 = vmax.f32 %v284, 0.0
    %v360 = vmax.f32 %v286, 0.0
    %v361 = vmax.f32 %v355, 0.0
    %v362 = vmax.f32 %v357, 0.0
    %v363 = vld [vmem:[%s6] sm:$0xff]
    %v364 = vld [vmem:[%s6 + $0x8] sm:$0xff]
    %v365 = vld [vmem:[%s6 + $0x10] sm:$0xff]
    %v366 = vld [vmem:[%s6 + $0x18] sm:$0xff]
    %v367 = vld [vmem:[%s6 + $0x20] sm:$0xff]
    %v368 = vld [vmem:[%s6 + $0x28] sm:$0xff]
    %v369 = vld [vmem:[%s6 + $0x30] sm:$0xff]
    %v370 = vld [vmem:[%s6 + $0x38] sm:$0xff]
    %v371 = vld [vmem:[%s6 + $0x40] sm:$0xff]
    %v372 = vld [vmem:[%s6 + $0x48] sm:$0xff]
    %v373 = vld [vmem:[%s6 + $0x50] sm:$0xff]
    %v374 = vld [vmem:[%s6 + $0x58] sm:$0xff]
    %v375 = vld [vmem:[%s6 + $0x60] sm:$0xff]
    %v376 = vld [vmem:[%s6 + $0x68] sm:$0xff]
    %v377 = vld [vmem:[%s6 + $0x70] sm:$0xff]
    %v378 = vld [vmem:[%s6 + $0x78] sm:$0xff]
    %v379 = vld [vmem:[%s6 + $0x80] sm:$0xff]
    %v380 = vld [vmem:[%s6 + $0x88] sm:$0xff]
    %v381 = vld [vmem:[%s6 + $0x90] sm:$0xff]
    %v382 = vld [vmem:[%s6 + $0x98] sm:$0xff]
    %v383 = vld [vmem:[%s6 + $0xa0] sm:$0xff]
    %v384 = vld [vmem:[%s6 + $0xa8] sm:$0xff]
    %v385 = vld [vmem:[%s6 + $0xb0] sm:$0xff]
    %v386 = vld [vmem:[%s6 + $0xb8] sm:$0xff]
    %v387 = vld [vmem:[%s6 + $0xc0] sm:$0xff]
    %v388 = vld [vmem:[%s6 + $0xc8] sm:$0xff]
    %v389 = vld [vmem:[%s6 + $0xd0] sm:$0xff]
    %v390 = vld [vmem:[%s6 + $0xd8] sm:$0xff]
    %v391 = vld [vmem:[%s6 + $0xe0] sm:$0xff]
    %v392 = vld [vmem:[%s6 + $0xe8] sm:$0xff]
    %v393 = vld [vmem:[%s6 + $0xf0] sm:$0xff]
    %v394 = vld [vmem:[%s6 + $0xf8] sm:$0xff]
    %v395 = vld [vmem:[%s6 + $0x100] sm:$0xff]
    %v396 = vld [vmem:[%s6 + $0x108] sm:$0xff]
    %v397 = vld [vmem:[%s6 + $0x110] sm:$0xff]
    %v398 = vld [vmem:[%s6 + $0x118] sm:$0xff]
    %v399 = vld [vmem:[%s6 + $0x120] sm:$0xff]
    %v400 = vld [vmem:[%s6 + $0x128] sm:$0xff]
    %v401 = vld [vmem:[%s6 + $0x130] sm:$0xff]
    %v402 = vld [vmem:[%s6 + $0x138] sm:$0xff]
    %v403 = vld [vmem:[%s6 + $0x140] sm:$0xff]
    %v404 = vld [vmem:[%s6 + $0x148] sm:$0xff]
    %v405 = vld [vmem:[%s6 + $0x150] sm:$0xff]
    %v406 = vld [vmem:[%s6 + $0x158] sm:$0xff]
    %v407 = vld [vmem:[%s6 + $0x160] sm:$0xff]
    %v408 = vld [vmem:[%s6 + $0x168] sm:$0xff]
    %v409 = vld [vmem:[%s6 + $0x170] sm:$0xff]
    %v410 = vld [vmem:[%s6 + $0x178] sm:$0xff]
    %v411 = vld [vmem:[%s6 + $0x180] sm:$0xff]
    %v412 = vld [vmem:[%s6 + $0x188] sm:$0xff]
    %v413 = vld [vmem:[%s6 + $0x190] sm:$0xff]
    %v414 = vld [vmem:[%s6 + $0x198] sm:$0xff]
    %v415 = vld [vmem:[%s6 + $0x1a0] sm:$0xff]
    %v416 = vld [vmem:[%s6 + $0x1a8] sm:$0xff]
    %v417 = vld [vmem:[%s6 + $0x1b0] sm:$0xff]
    %v418 = vld [vmem:[%s6 + $0x1b8] sm:$0xff]
    %v419 = vld [vmem:[%s6 + $0x1c0] sm:$0xff]
    %v420 = vld [vmem:[%s6 + $0x1c8] sm:$0xff]
    %v421 = vld [vmem:[%s6 + $0x1d0] sm:$0xff]
    %v422 = vld [vmem:[%s6 + $0x1d8] sm:$0xff]
    %v423 = vld [vmem:[%s6 + $0x1e0] sm:$0xff]
    %v424 = vld [vmem:[%s6 + $0x1e8] sm:$0xff]
    %v425 = vld [vmem:[%s6 + $0x1f0] sm:$0xff]
    %v426 = vld [vmem:[%s6 + $0x1f8] sm:$0xff]
    %v427 = vld [vmem:[%s6 + $0x200] sm:$0xff]
    %v428 = vld [vmem:[%s6 + $0x208] sm:$0xff]
    %v429 = vld [vmem:[%s6 + $0x210] sm:$0xff]
    %v430 = vld [vmem:[%s6 + $0x218] sm:$0xff]
    %v431 = vld [vmem:[%s6 + $0x220] sm:$0xff]
    %v432 = vld [vmem:[%s6 + $0x228] sm:$0xff]
    %v433 = vld [vmem:[%s6 + $0x230] sm:$0xff]
    %v434 = vld [vmem:[%s6 + $0x238] sm:$0xff]
    %v435 = vld [vmem:[%s6 + $0x240] sm:$0xff]
    %v436 = vld [vmem:[%s6 + $0x248] sm:$0xff]
    %v437 = vld [vmem:[%s6 + $0x250] sm:$0xff]
    %v438 = vld [vmem:[%s6 + $0x258] sm:$0xff]
    %v439 = vld [vmem:[%s6 + $0x260] sm:$0xff]
    %v440 = vld [vmem:[%s6 + $0x268] sm:$0xff]
    %v441 = vld [vmem:[%s6 + $0x270] sm:$0xff]
    %v442 = vld [vmem:[%s6 + $0x278] sm:$0xff]
    %v443 = vld [vmem:[%s6 + $0x280] sm:$0xff]
    %v444 = vld [vmem:[%s6 + $0x288] sm:$0xff]
    %v445 = vld [vmem:[%s6 + $0x290] sm:$0xff]
    %v446 = vld [vmem:[%s6 + $0x298] sm:$0xff]
    %v447 = vld [vmem:[%s6 + $0x2a0] sm:$0xff]
    %v448 = vld [vmem:[%s6 + $0x2a8] sm:$0xff]
    %v449 = vld [vmem:[%s6 + $0x2b0] sm:$0xff]
    %v450 = vld [vmem:[%s6 + $0x2b8] sm:$0xff]
    %v451 = vld [vmem:[%s6 + $0x2c0] sm:$0xff]
    %v452 = vld [vmem:[%s6 + $0x2c8] sm:$0xff]
    %v453 = vld [vmem:[%s6 + $0x2d0] sm:$0xff]
    %v454 = vld [vmem:[%s6 + $0x2d8] sm:$0xff]
    %v455 = vld [vmem:[%s6 + $0x2e0] sm:$0xff]
    %v456 = vld [vmem:[%s6 + $0x2e8] sm:$0xff]
    %v457 = vld [vmem:[%s6 + $0x2f0] sm:$0xff]
    %v458 = vld [vmem:[%s6 + $0x2f8] sm:$0xff]
    %v459 = vld [vmem:[%s6 + $0x300] sm:$0xff]
    %v460 = vld [vmem:[%s6 + $0x308] sm:$0xff]
    %v461 = vld [vmem:[%s6 + $0x310] sm:$0xff]
    %v462 = vld [vmem:[%s6 + $0x318] sm:$0xff]
    %v463 = vld [vmem:[%s6 + $0x320] sm:$0xff]
    %v464 = vld [vmem:[%s6 + $0x328] sm:$0xff]
    %v465 = vld [vmem:[%s6 + $0x330] sm:$0xff]
    %v466 = vld [vmem:[%s6 + $0x338] sm:$0xff]
    %v467 = vld [vmem:[%s6 + $0x340] sm:$0xff]
    %v468 = vld [vmem:[%s6 + $0x348] sm:$0xff]
    %v469 = vld [vmem:[%s6 + $0x350] sm:$0xff]
    %v470 = vld [vmem:[%s6 + $0x358] sm:$0xff]
    %v471 = vld [vmem:[%s6 + $0x360] sm:$0xff]
    %v472 = vld [vmem:[%s6 + $0x368] sm:$0xff]
    %v473 = vld [vmem:[%s6 + $0x370] sm:$0xff]
    %v474 = vld [vmem:[%s6 + $0x378] sm:$0xff]
    %v475 = vld [vmem:[%s6 + $0x380] sm:$0xff]
    %v476 = vld [vmem:[%s6 + $0x388] sm:$0xff]
    %v477 = vld [vmem:[%s6 + $0x390] sm:$0xff]
    %v478 = vld [vmem:[%s6 + $0x398] sm:$0xff]
    %v479 = vld [vmem:[%s6 + $0x3a0] sm:$0xff]
    %v480 = vld [vmem:[%s6 + $0x3a8] sm:$0xff]
    %v481 = vld [vmem:[%s6 + $0x3b0] sm:$0xff]
    %v482 = vld [vmem:[%s6 + $0x3b8] sm:$0xff]
    %v483 = vld [vmem:[%s6 + $0x3c0] sm:$0xff]
    %v484 = vld [vmem:[%s6 + $0x3c8] sm:$0xff]
    %v485 = vld [vmem:[%s6 + $0x3d0] sm:$0xff]
    %v486 = vld [vmem:[%s6 + $0x3d8] sm:$0xff]
    %v487 = vld [vmem:[%s6 + $0x3e0] sm:$0xff]
    %v488 = vld [vmem:[%s6 + $0x3e8] sm:$0xff]
    %v489 = vld [vmem:[%s6 + $0x3f0] sm:$0xff]
    %v490 = vld [vmem:[%s6 + $0x3f8] sm:$0xff]
    %v491 = vld [vmem:[%s7] sm:$0x3]
    %v493 = vlaneseq
    %v494 = vshrl.u32 %v493, 7
    %v495 = vsub.s32 0, %v494
    %v496 = vrot.slane %v491, %v495
    %v497 = vlaneseq
    %v498 = vshrl.u32 %v497, 7
    %v499 = vsub.s32 1, %v498
    %v500 = vrot.slane %v491, %v499
    %503 = vmatprep.subr.mxu0 %v394
    %504 = vmatpush1.msra.mxu0 %v393
    %505 = vmatprep.subr.mxu0 %v392
    %506 = vmatpush1.msra.mxu0 %v391
    %507 = vmatprep.subr.mxu0 %v390
    %508 = vmatpush1.msra.mxu0 %v389
    %509 = vmatprep.subr.mxu0 %v388
    %510 = vmatpush1.msra.mxu0 %v387
    %511 = vmatprep.subr.mxu0 %v386
    %512 = vmatpush1.msra.mxu0 %v385
    %513 = vmatprep.subr.mxu0 %v384
    %514 = vmatpush1.msra.mxu0 %v383
    %515 = vmatprep.subr.mxu0 %v382
    %516 = vmatpush1.msra.mxu0 %v381
    %517 = vmatprep.subr.mxu0 %v380
    %518 = vmatpush1.msra.mxu0 %v379
    %519 = vmatprep.subr.mxu0 %v378
    %520 = vmatpush1.msra.mxu0 %v377
    %521 = vmatprep.subr.mxu0 %v376
    %522 = vmatpush1.msra.mxu0 %v375
    %523 = vmatprep.subr.mxu0 %v374
    %524 = vmatpush1.msra.mxu0 %v373
    %525 = vmatprep.subr.mxu0 %v372
    %526 = vmatpush1.msra.mxu0 %v371
    %527 = vmatprep.subr.mxu0 %v370
    %528 = vmatpush1.msra.mxu0 %v369
    %529 = vmatprep.subr.mxu0 %v368
    %530 = vmatpush1.msra.mxu0 %v367
    %531 = vmatprep.subr.mxu0 %v366
    %532 = vmatpush1.msra.mxu0 %v365
    %533 = vmatprep.subr.mxu0 %v364
    %534 = vmatpush1.msra.mxu0 %v363
    %535 = vmatprep.subr.mxu0 %v426
    %536 = vmatpush2.msra.mxu0 %v425
    %537 = vmatprep.subr.mxu0 %v424
    %538 = vmatpush2.msra.mxu0 %v423
    %539 = vmatprep.subr.mxu0 %v422
    %540 = vmatpush2.msra.mxu0 %v421
    %541 = vmatprep.subr.mxu0 %v420
    %542 = vmatpush2.msra.mxu0 %v419
    %543 = vmatprep.subr.mxu0 %v418
    %544 = vmatpush2.msra.mxu0 %v417
    %545 = vmatprep.subr.mxu0 %v416
    %546 = vmatpush2.msra.mxu0 %v415
    %547 = vmatprep.subr.mxu0 %v414
    %548 = vmatpush2.msra.mxu0 %v413
    %549 = vmatprep.subr.mxu0 %v412
    %550 = vmatpush2.msra.mxu0 %v411
    %551 = vmatprep.subr.mxu0 %v410
    %552 = vmatpush2.msra.mxu0 %v409
    %553 = vmatprep.subr.mxu0 %v408
    %554 = vmatpush2.msra.mxu0 %v407
    %555 = vmatprep.subr.mxu0 %v406
    %556 = vmatpush2.msra.mxu0 %v405
    %557 = vmatprep.subr.mxu0 %v404
    %558 = vmatpush2.msra.mxu0 %v403
    %559 = vmatprep.subr.mxu0 %v402
    %560 = vmatpush2.msra.mxu0 %v401
    %561 = vmatprep.subr.mxu0 %v400
    %562 = vmatpush2.msra.mxu0 %v399
    %563 = vmatprep.subr.mxu0 %v398
    %564 = vmatpush2.msra.mxu0 %v397
    %565 = vmatprep.subr.mxu0 %v396
    %566 = vmatpush2.msra.mxu0 %v395
    %567 = vmatprep.mubr.f32.mxu0 %v360
    %568 = vmatmul.mubr.f32.gmra.mxu0 %v359
    %v569 = vpop.f32.mrf.mxu0
    %v570 = vadd.f32 %v496, %v569
    %v571 = vpop.f32.mrf.mxu0
    %v572 = vadd.f32 %v500, %v571
    %573 = vdwg.mxu0
    %574 = vmatprep.subr.mxu0 %v458
    %575 = vmatpush1.msra.mxu0 %v457
    %576 = vmatprep.subr.mxu0 %v456
    %577 = vmatpush1.msra.mxu0 %v455
    %578 = vmatprep.subr.mxu0 %v454
    %579 = vmatpush1.msra.mxu0 %v453
    %580 = vmatprep.subr.mxu0 %v452
    %581 = vmatpush1.msra.mxu0 %v451
    %582 = vmatprep.subr.mxu0 %v450
    %583 = vmatpush1.msra.mxu0 %v449
    %584 = vmatprep.subr.mxu0 %v448
    %585 = vmatpush1.msra.mxu0 %v447
    %586 = vmatprep.subr.mxu0 %v446
    %587 = vmatpush1.msra.mxu0 %v445
    %588 = vmatprep.subr.mxu0 %v444
    %589 = vmatpush1.msra.mxu0 %v443
    %590 = vmatprep.subr.mxu0 %v442
    %591 = vmatpush1.msra.mxu0 %v441
    %592 = vmatprep.subr.mxu0 %v440
    %593 = vmatpush1.msra.mxu0 %v439
    %594 = vmatprep.subr.mxu0 %v438
    %595 = vmatpush1.msra.mxu0 %v437
    %596 = vmatprep.subr.mxu0 %v436
    %597 = vmatpush1.msra.mxu0 %v435
    %598 = vmatprep.subr.mxu0 %v434
    %599 = vmatpush1.msra.mxu0 %v433
    %600 = vmatprep.subr.mxu0 %v432
    %601 = vmatpush1.msra.mxu0 %v431
    %602 = vmatprep.subr.mxu0 %v430
    %603 = vmatpush1.msra.mxu0 %v429
    %604 = vmatprep.subr.mxu0 %v428
    %605 = vmatpush1.msra.mxu0 %v427
    %606 = vmatprep.subr.mxu0 %v490
    %607 = vmatpush2.msra.mxu0 %v489
    %608 = vmatprep.subr.mxu0 %v488
    %609 = vmatpush2.msra.mxu0 %v487
    %610 = vmatprep.subr.mxu0 %v486
    %611 = vmatpush2.msra.mxu0 %v485
    %612 = vmatprep.subr.mxu0 %v484
    %613 = vmatpush2.msra.mxu0 %v483
    %614 = vmatprep.subr.mxu0 %v482
    %615 = vmatpush2.msra.mxu0 %v481
    %616 = vmatprep.subr.mxu0 %v480
    %617 = vmatpush2.msra.mxu0 %v479
    %618 = vmatprep.subr.mxu0 %v478
    %619 = vmatpush2.msra.mxu0 %v477
    %620 = vmatprep.subr.mxu0 %v476
    %621 = vmatpush2.msra.mxu0 %v475
    %622 = vmatprep.subr.mxu0 %v474
    %623 = vmatpush2.msra.mxu0 %v473
    %624 = vmatprep.subr.mxu0 %v472
    %625 = vmatpush2.msra.mxu0 %v471
    %626 = vmatprep.subr.mxu0 %v470
    %627 = vmatpush2.msra.mxu0 %v469
    %628 = vmatprep.subr.mxu0 %v468
    %629 = vmatpush2.msra.mxu0 %v467
    %630 = vmatprep.subr.mxu0 %v466
    %631 = vmatpush2.msra.mxu0 %v465
    %632 = vmatprep.subr.mxu0 %v464
    %633 = vmatpush2.msra.mxu0 %v463
    %634 = vmatprep.subr.mxu0 %v462
    %635 = vmatpush2.msra.mxu0 %v461
    %636 = vmatprep.subr.mxu0 %v460
    %637 = vmatpush2.msra.mxu0 %v459
    %638 = vmatprep.mubr.f32.mxu0 %v362
    %639 = vmatmul.mubr.f32.gmra.mxu0 %v361
    %v640 = vpop.f32.mrf.mxu0
    %v641 = vadd.f32 %v570, %v640
    %v642 = vpop.f32.mrf.mxu0
    %v643 = vadd.f32 %v572, %v642
    %644 = vdwg.mxu0
    %v645 = vmax.f32 %v641, 0.0
    %v646 = vmax.f32 %v643, 0.0
    %v647 = vld [vmem:[%s8] sm:$0xff]
    %v648 = vld [vmem:[%s8 + $0x8] sm:$0xff]
    %v649 = vld [vmem:[%s8 + $0x10] sm:$0xff]
    %v650 = vld [vmem:[%s8 + $0x18] sm:$0xff]
    %v651 = vld [vmem:[%s8 + $0x20] sm:$0xff]
    %v652 = vld [vmem:[%s8 + $0x28] sm:$0xff]
    %v653 = vld [vmem:[%s8 + $0x30] sm:$0xff]
    %v654 = vld [vmem:[%s8 + $0x38] sm:$0xff]
    %v655 = vld [vmem:[%s8 + $0x40] sm:$0xff]
    %v656 = vld [vmem:[%s8 + $0x48] sm:$0xff]
    %v657 = vld [vmem:[%s8 + $0x50] sm:$0xff]
    %v658 = vld [vmem:[%s8 + $0x58] sm:$0xff]
    %v659 = vld [vmem:[%s8 + $0x60] sm:$0xff]
    %v660 = vld [vmem:[%s8 + $0x68] sm:$0xff]
    %v661 = vld [vmem:[%s8 + $0x70] sm:$0xff]
    %v662 = vld [vmem:[%s8 + $0x78] sm:$0xff]
    %v663 = vld [vmem:[%s8 + $0x80] sm:$0xff]
    %v664 = vld [vmem:[%s8 + $0x88] sm:$0xff]
    %v665 = vld [vmem:[%s8 + $0x90] sm:$0xff]
    %v666 = vld [vmem:[%s8 + $0x98] sm:$0xff]
    %v667 = vld [vmem:[%s8 + $0xa0] sm:$0xff]
    %v668 = vld [vmem:[%s8 + $0xa8] sm:$0xff]
    %v669 = vld [vmem:[%s8 + $0xb0] sm:$0xff]
    %v670 = vld [vmem:[%s8 + $0xb8] sm:$0xff]
    %v671 = vld [vmem:[%s8 + $0xc0] sm:$0xff]
    %v672 = vld [vmem:[%s8 + $0xc8] sm:$0xff]
    %v673 = vld [vmem:[%s8 + $0xd0] sm:$0xff]
    %v674 = vld [vmem:[%s8 + $0xd8] sm:$0xff]
    %v675 = vld [vmem:[%s8 + $0xe0] sm:$0xff]
    %v676 = vld [vmem:[%s8 + $0xe8] sm:$0xff]
    %v677 = vld [vmem:[%s8 + $0xf0] sm:$0xff]
    %v678 = vld [vmem:[%s8 + $0xf8] sm:$0xff]
    %v679 = vld [vmem:[%s8 + $0x100] sm:$0xff]
    %v680 = vld [vmem:[%s8 + $0x108] sm:$0xff]
    %v681 = vld [vmem:[%s8 + $0x110] sm:$0xff]
    %v682 = vld [vmem:[%s8 + $0x118] sm:$0xff]
    %v683 = vld [vmem:[%s8 + $0x120] sm:$0xff]
    %v684 = vld [vmem:[%s8 + $0x128] sm:$0xff]
    %v685 = vld [vmem:[%s8 + $0x130] sm:$0xff]
    %v686 = vld [vmem:[%s8 + $0x138] sm:$0xff]
    %v687 = vld [vmem:[%s8 + $0x140] sm:$0xff]
    %v688 = vld [vmem:[%s8 + $0x148] sm:$0xff]
    %v689 = vld [vmem:[%s8 + $0x150] sm:$0xff]
    %v690 = vld [vmem:[%s8 + $0x158] sm:$0xff]
    %v691 = vld [vmem:[%s8 + $0x160] sm:$0xff]
    %v692 = vld [vmem:[%s8 + $0x168] sm:$0xff]
    %v693 = vld [vmem:[%s8 + $0x170] sm:$0xff]
    %v694 = vld [vmem:[%s8 + $0x178] sm:$0xff]
    %v695 = vld [vmem:[%s8 + $0x180] sm:$0xff]
    %v696 = vld [vmem:[%s8 + $0x188] sm:$0xff]
    %v697 = vld [vmem:[%s8 + $0x190] sm:$0xff]
    %v698 = vld [vmem:[%s8 + $0x198] sm:$0xff]
    %v699 = vld [vmem:[%s8 + $0x1a0] sm:$0xff]
    %v700 = vld [vmem:[%s8 + $0x1a8] sm:$0xff]
    %v701 = vld [vmem:[%s8 + $0x1b0] sm:$0xff]
    %v702 = vld [vmem:[%s8 + $0x1b8] sm:$0xff]
    %v703 = vld [vmem:[%s8 + $0x1c0] sm:$0xff]
    %v704 = vld [vmem:[%s8 + $0x1c8] sm:$0xff]
    %v705 = vld [vmem:[%s8 + $0x1d0] sm:$0xff]
    %v706 = vld [vmem:[%s8 + $0x1d8] sm:$0xff]
    %v707 = vld [vmem:[%s8 + $0x1e0] sm:$0xff]
    %v708 = vld [vmem:[%s8 + $0x1e8] sm:$0xff]
    %v709 = vld [vmem:[%s8 + $0x1f0] sm:$0xff]
    %v710 = vld [vmem:[%s8 + $0x1f8] sm:$0xff]
    %v711 = vld [vmem:[%s9] sm:$0x3]
    %v713 = vlaneseq
    %v714 = vshrl.u32 %v713, 7
    %v715 = vsub.s32 0, %v714
    %v716 = vrot.slane %v711, %v715
    %v717 = vlaneseq
    %v718 = vshrl.u32 %v717, 7
    %v719 = vsub.s32 1, %v718
    %v720 = vrot.slane %v711, %v719
    %723 = vmatprep.subr.mxu0 %v678
    %724 = vmatpush1.msra.mxu0 %v677
    %725 = vmatprep.subr.mxu0 %v676
    %726 = vmatpush1.msra.mxu0 %v675
    %727 = vmatprep.subr.mxu0 %v674
    %728 = vmatpush1.msra.mxu0 %v673
    %729 = vmatprep.subr.mxu0 %v672
    %730 = vmatpush1.msra.mxu0 %v671
    %731 = vmatprep.subr.mxu0 %v670
    %732 = vmatpush1.msra.mxu0 %v669
    %733 = vmatprep.subr.mxu0 %v668
    %734 = vmatpush1.msra.mxu0 %v667
    %735 = vmatprep.subr.mxu0 %v666
    %736 = vmatpush1.msra.mxu0 %v665
    %737 = vmatprep.subr.mxu0 %v664
    %738 = vmatpush1.msra.mxu0 %v663
    %739 = vmatprep.subr.mxu0 %v662
    %740 = vmatpush1.msra.mxu0 %v661
    %741 = vmatprep.subr.mxu0 %v660
    %742 = vmatpush1.msra.mxu0 %v659
    %743 = vmatprep.subr.mxu0 %v658
    %744 = vmatpush1.msra.mxu0 %v657
    %745 = vmatprep.subr.mxu0 %v656
    %746 = vmatpush1.msra.mxu0 %v655
    %747 = vmatprep.subr.mxu0 %v654
    %748 = vmatpush1.msra.mxu0 %v653
    %749 = vmatprep.subr.mxu0 %v652
    %750 = vmatpush1.msra.mxu0 %v651
    %751 = vmatprep.subr.mxu0 %v650
    %752 = vmatpush1.msra.mxu0 %v649
    %753 = vmatprep.subr.mxu0 %v648
    %754 = vmatpush1.msra.mxu0 %v647
    %755 = vmatprep.subr.mxu0 %v710
    %756 = vmatpush2.msra.mxu0 %v709
    %757 = vmatprep.subr.mxu0 %v708
    %758 = vmatpush2.msra.mxu0 %v707
    %759 = vmatprep.subr.mxu0 %v706
    %760 = vmatpush2.msra.mxu0 %v705
    %761 = vmatprep.subr.mxu0 %v704
    %762 = vmatpush2.msra.mxu0 %v703
    %763 = vmatprep.subr.mxu0 %v702
    %764 = vmatpush2.msra.mxu0 %v701
    %765 = vmatprep.subr.mxu0 %v700
    %766 = vmatpush2.msra.mxu0 %v699
    %767 = vmatprep.subr.mxu0 %v698
    %768 = vmatpush2.msra.mxu0 %v697
    %769 = vmatprep.subr.mxu0 %v696
    %770 = vmatpush2.msra.mxu0 %v695
    %771 = vmatprep.subr.mxu0 %v694
    %772 = vmatpush2.msra.mxu0 %v693
    %773 = vmatprep.subr.mxu0 %v692
    %774 = vmatpush2.msra.mxu0 %v691
    %775 = vmatprep.subr.mxu0 %v690
    %776 = vmatpush2.msra.mxu0 %v689
    %777 = vmatprep.subr.mxu0 %v688
    %778 = vmatpush2.msra.mxu0 %v687
    %779 = vmatprep.subr.mxu0 %v686
    %780 = vmatpush2.msra.mxu0 %v685
    %781 = vmatprep.subr.mxu0 %v684
    %782 = vmatpush2.msra.mxu0 %v683
    %783 = vmatprep.subr.mxu0 %v682
    %784 = vmatpush2.msra.mxu0 %v681
    %785 = vmatprep.subr.mxu0 %v680
    %786 = vmatpush2.msra.mxu0 %v679
    %787 = vmatprep.mubr.f32.mxu0 %v646
    %788 = vmatmul.mubr.f32.gmra.mxu0 %v645
    %v789 = vpop.f32.mrf.mxu0
    %v790 = vadd.f32 %v716, %v789
    %v791 = vpop.f32.mrf.mxu0
    %v792 = vadd.f32 %v720, %v791
    %793 = vdwg.mxu0
    %v794 = vmax.f32 %v790, 0.0
    %v795 = vmax.f32 %v792, 0.0
    %v796 = vlaneseq
    %v797 = vshrl.u32 %v796, 7
    %v798 = vsub.s32 0, %v797
    %v799 = vrot.slane %v794, %v798
    %v800 = vld [vmem:[%s10] sm:$0xff]
    %v801 = vld [vmem:[%s10 + $0x8] sm:$0xff]
    %v802 = vmul.f32 %v799, %v800
    %v803 = vmul.f32 %v799, %v801
    %v804 = vld [vmem:[%s11] sm:$0xff]
    %v805 = vld [vmem:[%s11 + $0x8] sm:$0xff]
    %v806 = vld [vmem:[%s11 + $0x10] sm:$0xff]
    %v807 = vld [vmem:[%s11 + $0x18] sm:$0xff]
    %v808 = vld [vmem:[%s11 + $0x20] sm:$0xff]
    %v809 = vld [vmem:[%s11 + $0x28] sm:$0xff]
    %v810 = vld [vmem:[%s11 + $0x30] sm:$0xff]
    %v811 = vld [vmem:[%s11 + $0x38] sm:$0xff]
    %v812 = vld [vmem:[%s11 + $0x40] sm:$0xff]
    %v813 = vld [vmem:[%s11 + $0x48] sm:$0xff]
    %v814 = vld [vmem:[%s11 + $0x50] sm:$0xff]
    %v815 = vld [vmem:[%s11 + $0x58] sm:$0xff]
    %v816 = vld [vmem:[%s11 + $0x60] sm:$0xff]
    %v817 = vld [vmem:[%s11 + $0x68] sm:$0xff]
    %v818 = vld [vmem:[%s11 + $0x70] sm:$0xff]
    %v819 = vld [vmem:[%s11 + $0x78] sm:$0xff]
    %820 = vmatprep.subr.mxu0 0.0
    %821 = vmatpush1.msra.mxu0 %v819
    %822 = vmatprep.subr.mxu0 0.0
    %823 = vmatpush1.msra.mxu0 %v818
    %824 = vmatprep.subr.mxu0 0.0
    %825 = vmatpush1.msra.mxu0 %v817
    %826 = vmatprep.subr.mxu0 0.0
    %827 = vmatpush1.msra.mxu0 %v816
    %828 = vmatprep.subr.mxu0 0.0
    %829 = vmatpush1.msra.mxu0 %v815
    %830 = vmatprep.subr.mxu0 0.0
    %831 = vmatpush1.msra.mxu0 %v814
    %832 = vmatprep.subr.mxu0 0.0
    %833 = vmatpush1.msra.mxu0 %v813
    %834 = vmatprep.subr.mxu0 0.0
    %835 = vmatpush1.msra.mxu0 %v812
    %836 = vmatprep.subr.mxu0 0.0
    %837 = vmatpush1.msra.mxu0 %v811
    %838 = vmatprep.subr.mxu0 0.0
    %839 = vmatpush1.msra.mxu0 %v810
    %840 = vmatprep.subr.mxu0 0.0
    %841 = vmatpush1.msra.mxu0 %v809
    %842 = vmatprep.subr.mxu0 0.0
    %843 = vmatpush1.msra.mxu0 %v808
    %844 = vmatprep.subr.mxu0 0.0
    %845 = vmatpush1.msra.mxu0 %v807
    %846 = vmatprep.subr.mxu0 0.0
    %847 = vmatpush1.msra.mxu0 %v806
    %848 = vmatprep.subr.mxu0 0.0
    %849 = vmatpush1.msra.mxu0 %v805
    %850 = vmatprep.subr.mxu0 0.0
    %851 = vmatpush1.msra.mxu0 %v804
    %852 = vmatprep.subr.mxu0 0.0
    %853 = vmatpush2.msra.mxu0 0.0
    %854 = vmatprep.subr.mxu0 0.0
    %855 = vmatpush2.msra.mxu0 0.0
    %856 = vmatprep.subr.mxu0 0.0
    %857 = vmatpush2.msra.mxu0 0.0
    %858 = vmatprep.subr.mxu0 0.0
    %859 = vmatpush2.msra.mxu0 0.0
    %860 = vmatprep.subr.mxu0 0.0
    %861 = vmatpush2.msra.mxu0 0.0
    %862 = vmatprep.subr.mxu0 0.0
    %863 = vmatpush2.msra.mxu0 0.0
    %864 = vmatprep.subr.mxu0 0.0
    %865 = vmatpush2.msra.mxu0 0.0
    %866 = vmatprep.subr.mxu0 0.0
    %867 = vmatpush2.msra.mxu0 0.0
    %868 = vmatprep.subr.mxu0 0.0
    %869 = vmatpush2.msra.mxu0 0.0
    %870 = vmatprep.subr.mxu0 0.0
    %871 = vmatpush2.msra.mxu0 0.0
    %872 = vmatprep.subr.mxu0 0.0
    %873 = vmatpush2.msra.mxu0 0.0
    %874 = vmatprep.subr.mxu0 0.0
    %875 = vmatpush2.msra.mxu0 0.0
    %876 = vmatprep.subr.mxu0 0.0
    %877 = vmatpush2.msra.mxu0 0.0
    %878 = vmatprep.subr.mxu0 0.0
    %879 = vmatpush2.msra.mxu0 0.0
    %880 = vmatprep.subr.mxu0 0.0
    %881 = vmatpush2.msra.mxu0 0.0
    %882 = vmatprep.subr.mxu0 0.0
    %883 = vmatpush2.msra.mxu0 0.0
    %884 = vmatprep.mubr.f32.mxu0 0.0
    %885 = vmatmul.mubr.f32.gmra.mxu0 %v802
    %v886 = vpop.f32.mrf.mxu0
    %v887 = vadd.f32 0.0, %v886
    %v888 = vpop.f32.mrf.mxu0
    %889 = vmatprep.mubr.f32.mxu0 0.0
    %890 = vmatmul.mubr.f32.gmra.mxu0 %v803
    %v891 = vpop.f32.mrf.mxu0
    %v892 = vadd.f32 0.0, %v891
    %v893 = vpop.f32.mrf.mxu0
    %894 = vdwg.mxu0
    %v895 = vlaneseq
    %v896 = vshrl.u32 %v895, 7
    %v897 = vsub.s32 0, %v896
    %v898 = vrot.slane %v795, %v897
    %v899 = vld [vmem:[%s12] sm:$0xff]
    %v900 = vmul.f32 %v898, %v899
    %v901 = vld [vmem:[%s13] sm:$0xff]
    %v902 = vld [vmem:[%s13 + $0x8] sm:$0xff]
    %v903 = vld [vmem:[%s13 + $0x10] sm:$0xff]
    %v904 = vld [vmem:[%s13 + $0x18] sm:$0xff]
    %v905 = vld [vmem:[%s13 + $0x20] sm:$0xff]
    %v906 = vld [vmem:[%s13 + $0x28] sm:$0xff]
    %v907 = vld [vmem:[%s13 + $0x30] sm:$0xff]
    %v908 = vld [vmem:[%s13 + $0x38] sm:$0xff]
    %v909 = vld [vmem:[%s13 + $0x40] sm:$0xff]
    %v910 = vld [vmem:[%s13 + $0x48] sm:$0xff]
    %v911 = vld [vmem:[%s13 + $0x50] sm:$0xff]
    %v912 = vld [vmem:[%s13 + $0x58] sm:$0xff]
    %v913 = vld [vmem:[%s13 + $0x60] sm:$0xff]
    %v914 = vld [vmem:[%s13 + $0x68] sm:$0xff]
    %v915 = vld [vmem:[%s13 + $0x70] sm:$0xff]
    %v916 = vld [vmem:[%s13 + $0x78] sm:$0xff]
    %917 = vmatprep.subr.mxu0 0.0
    %918 = vmatpush1.msra.mxu0 %v916
    %919 = vmatprep.subr.mxu0 0.0
    %920 = vmatpush1.msra.mxu0 %v915
    %921 = vmatprep.subr.mxu0 0.0
    %922 = vmatpush1.msra.mxu0 %v914
    %923 = vmatprep.subr.mxu0 0.0
    %924 = vmatpush1.msra.mxu0 %v913
    %925 = vmatprep.subr.mxu0 0.0
    %926 = vmatpush1.msra.mxu0 %v912
    %927 = vmatprep.subr.mxu0 0.0
    %928 = vmatpush1.msra.mxu0 %v911
    %929 = vmatprep.subr.mxu0 0.0
    %930 = vmatpush1.msra.mxu0 %v910
    %931 = vmatprep.subr.mxu0 0.0
    %932 = vmatpush1.msra.mxu0 %v909
    %933 = vmatprep.subr.mxu0 0.0
    %934 = vmatpush1.msra.mxu0 %v908
    %935 = vmatprep.subr.mxu0 0.0
    %936 = vmatpush1.msra.mxu0 %v907
    %937 = vmatprep.subr.mxu0 0.0
    %938 = vmatpush1.msra.mxu0 %v906
    %939 = vmatprep.subr.mxu0 0.0
    %940 = vmatpush1.msra.mxu0 %v905
    %941 = vmatprep.subr.mxu0 0.0
    %942 = vmatpush1.msra.mxu0 %v904
    %943 = vmatprep.subr.mxu0 0.0
    %944 = vmatpush1.msra.mxu0 %v903
    %945 = vmatprep.subr.mxu0 0.0
    %946 = vmatpush1.msra.mxu0 %v902
    %947 = vmatprep.subr.mxu0 0.0
    %948 = vmatpush1.msra.mxu0 %v901
    %949 = vmatprep.subr.mxu0 0.0
    %950 = vmatpush2.msra.mxu0 0.0
    %951 = vmatprep.subr.mxu0 0.0
    %952 = vmatpush2.msra.mxu0 0.0
    %953 = vmatprep.subr.mxu0 0.0
    %954 = vmatpush2.msra.mxu0 0.0
    %955 = vmatprep.subr.mxu0 0.0
    %956 = vmatpush2.msra.mxu0 0.0
    %957 = vmatprep.subr.mxu0 0.0
    %958 = vmatpush2.msra.mxu0 0.0
    %959 = vmatprep.subr.mxu0 0.0
    %960 = vmatpush2.msra.mxu0 0.0
    %961 = vmatprep.subr.mxu0 0.0
    %962 = vmatpush2.msra.mxu0 0.0
    %963 = vmatprep.subr.mxu0 0.0
    %964 = vmatpush2.msra.mxu0 0.0
    %965 = vmatprep.subr.mxu0 0.0
    %966 = vmatpush2.msra.mxu0 0.0
    %967 = vmatprep.subr.mxu0 0.0
    %968 = vmatpush2.msra.mxu0 0.0
    %969 = vmatprep.subr.mxu0 0.0
    %970 = vmatpush2.msra.mxu0 0.0
    %971 = vmatprep.subr.mxu0 0.0
    %972 = vmatpush2.msra.mxu0 0.0
    %973 = vmatprep.subr.mxu0 0.0
    %974 = vmatpush2.msra.mxu0 0.0
    %975 = vmatprep.subr.mxu0 0.0
    %976 = vmatpush2.msra.mxu0 0.0
    %977 = vmatprep.subr.mxu0 0.0
    %978 = vmatpush2.msra.mxu0 0.0
    %979 = vmatprep.subr.mxu0 0.0
    %980 = vmatpush2.msra.mxu0 0.0
    %981 = vmatprep.mubr.f32.mxu0 0.0
    %982 = vmatmul.mubr.f32.gmra.mxu0 %v900
    %v983 = vpop.f32.mrf.mxu0
    %v984 = vadd.f32 0.0, %v983
    %v985 = vpop.f32.mrf.mxu0
    %986 = vdwg.mxu0
    %vm987 = vcmask 130048
    %v989 = vsel %vm987, %v50, 0
    %v992 = vsel %vm987, %v51, 0
    %v995 = vsel %vm987, %v54, 0
    %997 = vmatprep.subr.mxu0 0.0
    %998 = vmatpush1.xpose.msra.mxu0 0.0
    %999 = vmatprep.subr.mxu0 0.0
    %1000 = vmatpush1.xpose.msra.mxu0 0.0
    %1001 = vmatprep.subr.mxu0 0.0
    %1002 = vmatpush1.xpose.msra.mxu0 0.0
    %1003 = vmatprep.subr.mxu0 0.0
    %1004 = vmatpush1.xpose.msra.mxu0 0.0
    %1005 = vmatprep.subr.mxu0 0.0
    %1006 = vmatpush1.xpose.msra.mxu0 0.0
    %1007 = vmatprep.subr.mxu0 0.0
    %1008 = vmatpush1.xpose.msra.mxu0 0.0
    %1009 = vmatprep.subr.mxu0 0.0
    %1010 = vmatpush1.xpose.msra.mxu0 0.0
    %1011 = vmatprep.subr.mxu0 0.0
    %1012 = vmatpush1.xpose.msra.mxu0 0.0
    %1013 = vmatprep.subr.mxu0 0.0
    %1014 = vmatpush1.xpose.msra.mxu0 0.0
    %1015 = vmatprep.subr.mxu0 0.0
    %1016 = vmatpush1.xpose.msra.mxu0 0.0
    %1017 = vmatprep.subr.mxu0 0.0
    %1018 = vmatpush1.xpose.msra.mxu0 0.0
    %1019 = vmatprep.subr.mxu0 0.0
    %1020 = vmatpush1.xpose.msra.mxu0 0.0
    %1021 = vmatprep.subr.mxu0 0.0
    %1022 = vmatpush1.xpose.msra.mxu0 0.0
    %1023 = vmatprep.subr.mxu0 0.0
    %1024 = vmatpush1.xpose.msra.mxu0 0.0
    %1025 = vmatprep.subr.mxu0 0.0
    %1026 = vmatpush1.xpose.msra.mxu0 0.0
    %1027 = vmatprep.subr.mxu0 0.0
    %1028 = vmatpush1.xpose.msra.mxu0 %v995
    %1029 = vmatprep.subr.mxu0 0.0
    %1030 = vmatpush2.xpose.msra.mxu0 0.0
    %1031 = vmatprep.subr.mxu0 0.0
    %1032 = vmatpush2.xpose.msra.mxu0 0.0
    %1033 = vmatprep.subr.mxu0 0.0
    %1034 = vmatpush2.xpose.msra.mxu0 0.0
    %1035 = vmatprep.subr.mxu0 0.0
    %1036 = vmatpush2.xpose.msra.mxu0 0.0
    %1037 = vmatprep.subr.mxu0 0.0
    %1038 = vmatpush2.xpose.msra.mxu0 0.0
    %1039 = vmatprep.subr.mxu0 0.0
    %1040 = vmatpush2.xpose.msra.mxu0 0.0
    %1041 = vmatprep.subr.mxu0 0.0
    %1042 = vmatpush2.xpose.msra.mxu0 0.0
    %1043 = vmatprep.subr.mxu0 0.0
    %1044 = vmatpush2.xpose.msra.mxu0 0.0
    %1045 = vmatprep.subr.mxu0 0.0
    %1046 = vmatpush2.xpose.msra.mxu0 0.0
    %1047 = vmatprep.subr.mxu0 0.0
    %1048 = vmatpush2.xpose.msra.mxu0 0.0
    %1049 = vmatprep.subr.mxu0 0.0
    %1050 = vmatpush2.xpose.msra.mxu0 0.0
    %1051 = vmatprep.subr.mxu0 0.0
    %1052 = vmatpush2.xpose.msra.mxu0 0.0
    %1053 = vmatprep.subr.mxu0 0.0
    %1054 = vmatpush2.xpose.msra.mxu0 0.0
    %1055 = vmatprep.subr.mxu0 0.0
    %1056 = vmatpush2.xpose.msra.mxu0 0.0
    %1057 = vmatprep.subr.mxu0 0.0
    %1058 = vmatpush2.xpose.msra.mxu0 0.0
    %1059 = vmatprep.subr.mxu0 0.0
    %1060 = vmatpush2.xpose.msra.mxu0 0.0
    %1061 = vmatprep.mubr.f32.mxu0 0.0
    %1062 = vmatmul.mubr.f32.gmra.mxu0 %v989
    %v1063 = vpop.f32.mrf.mxu0
    %v1064 = vadd.f32 0.0, %v1063
    %v1065 = vpop.f32.mrf.mxu0
    %1066 = vmatprep.mubr.f32.mxu0 0.0
    %1067 = vmatmul.mubr.f32.gmra.mxu0 %v992
    %v1068 = vpop.f32.mrf.mxu0
    %v1069 = vadd.f32 0.0, %v1068
    %v1070 = vpop.f32.mrf.mxu0
    %1071 = vdwg.mxu0
    %1072 = vmatprep.subr.mxu0 0.0
    %1073 = vmatpush1.xpose.msra.mxu0 0.0
    %1074 = vmatprep.subr.mxu0 0.0
    %1075 = vmatpush1.xpose.msra.mxu0 0.0
    %1076 = vmatprep.subr.mxu0 0.0
    %1077 = vmatpush1.xpose.msra.mxu0 0.0
    %1078 = vmatprep.subr.mxu0 0.0
    %1079 = vmatpush1.xpose.msra.mxu0 0.0
    %1080 = vmatprep.subr.mxu0 0.0
    %1081 = vmatpush1.xpose.msra.mxu0 0.0
    %1082 = vmatprep.subr.mxu0 0.0
    %1083 = vmatpush1.xpose.msra.mxu0 0.0
    %1084 = vmatprep.subr.mxu0 0.0
    %1085 = vmatpush1.xpose.msra.mxu0 0.0
    %1086 = vmatprep.subr.mxu0 0.0
    %1087 = vmatpush1.xpose.msra.mxu0 0.0
    %1088 = vmatprep.subr.mxu0 0.0
    %1089 = vmatpush1.xpose.msra.mxu0 0.0
    %1090 = vmatprep.subr.mxu0 0.0
    %1091 = vmatpush1.xpose.msra.mxu0 0.0
    %1092 = vmatprep.subr.mxu0 0.0
    %1093 = vmatpush1.xpose.msra.mxu0 0.0
    %1094 = vmatprep.subr.mxu0 0.0
    %1095 = vmatpush1.xpose.msra.mxu0 0.0
    %1096 = vmatprep.subr.mxu0 0.0
    %1097 = vmatpush1.xpose.msra.mxu0 0.0
    %1098 = vmatprep.subr.mxu0 0.0
    %1099 = vmatpush1.xpose.msra.mxu0 0.0
    %1100 = vmatprep.subr.mxu0 0.0
    %1101 = vmatpush1.xpose.msra.mxu0 0.0
    %1102 = vmatprep.subr.mxu0 0.0
    %1103 = vmatpush1.xpose.msra.mxu0 %v995
    %1104 = vmatprep.subr.mxu0 0.0
    %1105 = vmatpush2.xpose.msra.mxu0 0.0
    %1106 = vmatprep.subr.mxu0 0.0
    %1107 = vmatpush2.xpose.msra.mxu0 0.0
    %1108 = vmatprep.subr.mxu0 0.0
    %1109 = vmatpush2.xpose.msra.mxu0 0.0
    %1110 = vmatprep.subr.mxu0 0.0
    %1111 = vmatpush2.xpose.msra.mxu0 0.0
    %1112 = vmatprep.subr.mxu0 0.0
    %1113 = vmatpush2.xpose.msra.mxu0 0.0
    %1114 = vmatprep.subr.mxu0 0.0
    %1115 = vmatpush2.xpose.msra.mxu0 0.0
    %1116 = vmatprep.subr.mxu0 0.0
    %1117 = vmatpush2.xpose.msra.mxu0 0.0
    %1118 = vmatprep.subr.mxu0 0.0
    %1119 = vmatpush2.xpose.msra.mxu0 0.0
    %1120 = vmatprep.subr.mxu0 0.0
    %1121 = vmatpush2.xpose.msra.mxu0 0.0
    %1122 = vmatprep.subr.mxu0 0.0
    %1123 = vmatpush2.xpose.msra.mxu0 0.0
    %1124 = vmatprep.subr.mxu0 0.0
    %1125 = vmatpush2.xpose.msra.mxu0 0.0
    %1126 = vmatprep.subr.mxu0 0.0
    %1127 = vmatpush2.xpose.msra.mxu0 0.0
    %1128 = vmatprep.subr.mxu0 0.0
    %1129 = vmatpush2.xpose.msra.mxu0 0.0
    %1130 = vmatprep.subr.mxu0 0.0
    %1131 = vmatpush2.xpose.msra.mxu0 0.0
    %1132 = vmatprep.subr.mxu0 0.0
    %1133 = vmatpush2.xpose.msra.mxu0 0.0
    %1134 = vmatprep.subr.mxu0 0.0
    %1135 = vmatpush2.xpose.msra.mxu0 0.0
    %1136 = vmatprep.mubr.f32.mxu0 0.0
    %1137 = vmatmul.mubr.f32.gmra.mxu0 %v995
    %v1138 = vpop.f32.mrf.mxu0
    %v1139 = vadd.f32 0.0, %v1138
    %v1140 = vpop.f32.mrf.mxu0
    %1141 = vdwg.mxu0
    %vm1142 = vcmask 64512
    %v1144 = vsel %vm1142, %v52, 0
    %v1147 = vsel %vm1142, %v53, 0
    %1149 = vmatprep.subr.mxu0 0.0
    %1150 = vmatpush1.msra.mxu0 0.0
    %1151 = vmatprep.subr.mxu0 0.0
    %1152 = vmatpush1.msra.mxu0 0.0
    %1153 = vmatprep.subr.mxu0 0.0
    %1154 = vmatpush1.msra.mxu0 0.0
    %1155 = vmatprep.subr.mxu0 0.0
    %1156 = vmatpush1.msra.mxu0 0.0
    %1157 = vmatprep.subr.mxu0 0.0
    %1158 = vmatpush1.msra.mxu0 0.0
    %1159 = vmatprep.subr.mxu0 0.0
    %1160 = vmatpush1.msra.mxu0 0.0
    %1161 = vmatprep.subr.mxu0 0.0
    %1162 = vmatpush1.msra.mxu0 0.0
    %1163 = vmatprep.subr.mxu0 0.0
    %1164 = vmatpush1.msra.mxu0 0.0
    %1165 = vmatprep.subr.mxu0 0.0
    %1166 = vmatpush1.msra.mxu0 0.0
    %1167 = vmatprep.subr.mxu0 0.0
    %1168 = vmatpush1.msra.mxu0 0.0
    %1169 = vmatprep.subr.mxu0 0.0
    %1170 = vmatpush1.msra.mxu0 0.0
    %1171 = vmatprep.subr.mxu0 0.0
    %1172 = vmatpush1.msra.mxu0 0.0
    %1173 = vmatprep.subr.mxu0 0.0
    %1174 = vmatpush1.msra.mxu0 0.0
    %1175 = vmatprep.subr.mxu0 0.0
    %1176 = vmatpush1.msra.mxu0 0.0
    %1177 = vmatprep.subr.mxu0 0.0
    %1178 = vmatpush1.msra.mxu0 0.0
    %1179 = vmatprep.subr.mxu0 0.0
    %1180 = vmatpush1.msra.mxu0 %v1139
    %1181 = vmatprep.subr.mxu0 0.0
    %1182 = vmatpush2.msra.mxu0 0.0
    %1183 = vmatprep.subr.mxu0 0.0
    %1184 = vmatpush2.msra.mxu0 0.0
    %1185 = vmatprep.subr.mxu0 0.0
    %1186 = vmatpush2.msra.mxu0 0.0
    %1187 = vmatprep.subr.mxu0 0.0
    %1188 = vmatpush2.msra.mxu0 0.0
    %1189 = vmatprep.subr.mxu0 0.0
    %1190 = vmatpush2.msra.mxu0 0.0
    %1191 = vmatprep.subr.mxu0 0.0
    %1192 = vmatpush2.msra.mxu0 0.0
    %1193 = vmatprep.subr.mxu0 0.0
    %1194 = vmatpush2.msra.mxu0 0.0
    %1195 = vmatprep.subr.mxu0 0.0
    %1196 = vmatpush2.msra.mxu0 0.0
    %1197 = vmatprep.subr.mxu0 0.0
    %1198 = vmatpush2.msra.mxu0 0.0
    %1199 = vmatprep.subr.mxu0 0.0
    %1200 = vmatpush2.msra.mxu0 0.0
    %1201 = vmatprep.subr.mxu0 0.0
    %1202 = vmatpush2.msra.mxu0 0.0
    %1203 = vmatprep.subr.mxu0 0.0
    %1204 = vmatpush2.msra.mxu0 0.0
    %1205 = vmatprep.subr.mxu0 0.0
    %1206 = vmatpush2.msra.mxu0 0.0
    %1207 = vmatprep.subr.mxu0 0.0
    %1208 = vmatpush2.msra.mxu0 0.0
    %1209 = vmatprep.subr.mxu0 0.0
    %1210 = vmatpush2.msra.mxu0 0.0
    %1211 = vmatprep.subr.mxu0 0.0
    %1212 = vmatpush2.msra.mxu0 0.0
    %1213 = vmatprep.mubr.f32.mxu0 0.0
    %1214 = vmatmul.mubr.f32.gmra.mxu0 %v1144
    %v1215 = vpop.f32.mrf.mxu0
    %v1216 = vadd.f32 0.0001, %v1215
    %v1217 = vpop.f32.mrf.mxu0
    %1218 = vmatprep.mubr.f32.mxu0 0.0
    %1219 = vmatmul.mubr.f32.gmra.mxu0 %v1147
    %v1220 = vpop.f32.mrf.mxu0
    %v1221 = vadd.f32 0.0001, %v1220
    %v1222 = vpop.f32.mrf.mxu0
    %1223 = vdwg.mxu0
    %v1224 = vmul.f32 %v52, %v887
    %v1225 = vmul.f32 %v53, %v892
    %v1226 = vmul.f32 %v1224, %v1064
    %v1227 = vmul.f32 %v1225, %v1069
    %v1228 = vrcp.pop %v1216
    %v1229 = vrcp.pop %v1221
    %v1230 = vmul.f32 %v1226, %v1228
    %v1231 = vmul.f32 %v1227, %v1229
    %1232 = vst.msk [vmem:[%s14] sm:$0xff] %vm1142, %v1230
    %1233 = vst.msk [vmem:[%s14 + $0x8] sm:$0xff] %vm1142, %v1231
    %1234 = vxpose.xlu0.b32.start [1/16] %v1230, 128
    %1235 = vxpose.xlu0.b32.cont [2/16] %v1231, 128
    %1236 = vxpose.xlu0.b32.cont [3/16] 0.0, 128
    %1237 = vxpose.xlu0.b32.cont [4/16] 0.0, 128
    %1238 = vxpose.xlu0.b32.cont [5/16] 0.0, 128
    %1239 = vxpose.xlu0.b32.cont [6/16] 0.0, 128
    %1240 = vxpose.xlu0.b32.cont [7/16] 0.0, 128
    %1241 = vxpose.xlu0.b32.cont [8/16] 0.0, 128
    %1242 = vxpose.xlu0.b32.cont [9/16] 0.0, 128
    %1243 = vxpose.xlu0.b32.cont [10/16] 0.0, 128
    %1244 = vxpose.xlu0.b32.cont [11/16] 0.0, 128
    %1245 = vxpose.xlu0.b32.cont [12/16] 0.0, 128
    %1246 = vxpose.xlu0.b32.cont [13/16] 0.0, 128
    %1247 = vxpose.xlu0.b32.cont [14/16] 0.0, 128
    %1248 = vxpose.xlu0.b32.cont [15/16] 0.0, 128
    %1249 = vxpose.xlu0.b32.end [16/16] 0.0, 128
    %v1250 = vpop.trf.xlu0
    %v1251 = vpop.trf.xlu0
    %v1252 = vpop.trf.xlu0
    %v1253 = vpop.trf.xlu0
    %v1254 = vpop.trf.xlu0
    %v1255 = vpop.trf.xlu0
    %v1256 = vpop.trf.xlu0
    %v1257 = vpop.trf.xlu0
    %v1258 = vpop.trf.xlu0
    %v1259 = vpop.trf.xlu0
    %v1260 = vpop.trf.xlu0
    %v1261 = vpop.trf.xlu0
    %v1262 = vpop.trf.xlu0
    %v1263 = vpop.trf.xlu0
    %v1264 = vpop.trf.xlu0
    %v1265 = vpop.trf.xlu0
    %v1267 = vsel %vm987, %v1250, 0
    %1269 = vmatprep.subr.mxu0 0.0
    %1270 = vmatpush1.msra.mxu0 0.0
    %1271 = vmatprep.subr.mxu0 0.0
    %1272 = vmatpush1.msra.mxu0 0.0
    %1273 = vmatprep.subr.mxu0 0.0
    %1274 = vmatpush1.msra.mxu0 0.0
    %1275 = vmatprep.subr.mxu0 0.0
    %1276 = vmatpush1.msra.mxu0 0.0
    %1277 = vmatprep.subr.mxu0 0.0
    %1278 = vmatpush1.msra.mxu0 0.0
    %1279 = vmatprep.subr.mxu0 0.0
    %1280 = vmatpush1.msra.mxu0 0.0
    %1281 = vmatprep.subr.mxu0 0.0
    %1282 = vmatpush1.msra.mxu0 0.0
    %1283 = vmatprep.subr.mxu0 0.0
    %1284 = vmatpush1.msra.mxu0 0.0
    %1285 = vmatprep.subr.mxu0 0.0
    %1286 = vmatpush1.msra.mxu0 0.0
    %1287 = vmatprep.subr.mxu0 0.0
    %1288 = vmatpush1.msra.mxu0 0.0
    %1289 = vmatprep.subr.mxu0 0.0
    %1290 = vmatpush1.msra.mxu0 0.0
    %1291 = vmatprep.subr.mxu0 0.0
    %1292 = vmatpush1.msra.mxu0 0.0
    %1293 = vmatprep.subr.mxu0 0.0
    %1294 = vmatpush1.msra.mxu0 0.0
    %1295 = vmatprep.subr.mxu0 0.0
    %1296 = vmatpush1.msra.mxu0 0.0
    %1297 = vmatprep.subr.mxu0 0.0
    %1298 = vmatpush1.msra.mxu0 %v51
    %1299 = vmatprep.subr.mxu0 0.0
    %1300 = vmatpush1.msra.mxu0 %v50
    %1301 = vmatprep.subr.mxu0 0.0
    %1302 = vmatpush2.msra.mxu0 0.0
    %1303 = vmatprep.subr.mxu0 0.0
    %1304 = vmatpush2.msra.mxu0 0.0
    %1305 = vmatprep.subr.mxu0 0.0
    %1306 = vmatpush2.msra.mxu0 0.0
    %1307 = vmatprep.subr.mxu0 0.0
    %1308 = vmatpush2.msra.mxu0 0.0
    %1309 = vmatprep.subr.mxu0 0.0
    %1310 = vmatpush2.msra.mxu0 0.0
    %1311 = vmatprep.subr.mxu0 0.0
    %1312 = vmatpush2.msra.mxu0 0.0
    %1313 = vmatprep.subr.mxu0 0.0
    %1314 = vmatpush2.msra.mxu0 0.0
    %1315 = vmatprep.subr.mxu0 0.0
    %1316 = vmatpush2.msra.mxu0 0.0
    %1317 = vmatprep.subr.mxu0 0.0
    %1318 = vmatpush2.msra.mxu0 0.0
    %1319 = vmatprep.subr.mxu0 0.0
    %1320 = vmatpush2.msra.mxu0 0.0
    %1321 = vmatprep.subr.mxu0 0.0
    %1322 = vmatpush2.msra.mxu0 0.0
    %1323 = vmatprep.subr.mxu0 0.0
    %1324 = vmatpush2.msra.mxu0 0.0
    %1325 = vmatprep.subr.mxu0 0.0
    %1326 = vmatpush2.msra.mxu0 0.0
    %1327 = vmatprep.subr.mxu0 0.0
    %1328 = vmatpush2.msra.mxu0 0.0
    %1329 = vmatprep.subr.mxu0 0.0
    %1330 = vmatpush2.msra.mxu0 0.0
    %1331 = vmatprep.subr.mxu0 0.0
    %1332 = vmatpush2.msra.mxu0 0.0
    %1333 = vmatprep.mubr.f32.mxu0 0.0
    %1334 = vmatmul.mubr.f32.gmra.mxu0 %v1267
    %v1335 = vpop.f32.mrf.mxu0
    %v1336 = vadd.f32 0.0, %v1335
    %v1337 = vpop.f32.mrf.mxu0
    %1338 = vdwg.mxu0
    %1339 = vmatprep.subr.mxu0 0.0
    %1340 = vmatpush1.msra.mxu0 0.0
    %1341 = vmatprep.subr.mxu0 0.0
    %1342 = vmatpush1.msra.mxu0 0.0
    %1343 = vmatprep.subr.mxu0 0.0
    %1344 = vmatpush1.msra.mxu0 0.0
    %1345 = vmatprep.subr.mxu0 0.0
    %1346 = vmatpush1.msra.mxu0 0.0
    %1347 = vmatprep.subr.mxu0 0.0
    %1348 = vmatpush1.msra.mxu0 0.0
    %1349 = vmatprep.subr.mxu0 0.0
    %1350 = vmatpush1.msra.mxu0 0.0
    %1351 = vmatprep.subr.mxu0 0.0
    %1352 = vmatpush1.msra.mxu0 0.0
    %1353 = vmatprep.subr.mxu0 0.0
    %1354 = vmatpush1.msra.mxu0 0.0
    %1355 = vmatprep.subr.mxu0 0.0
    %1356 = vmatpush1.msra.mxu0 0.0
    %1357 = vmatprep.subr.mxu0 0.0
    %1358 = vmatpush1.msra.mxu0 0.0
    %1359 = vmatprep.subr.mxu0 0.0
    %1360 = vmatpush1.msra.mxu0 0.0
    %1361 = vmatprep.subr.mxu0 0.0
    %1362 = vmatpush1.msra.mxu0 0.0
    %1363 = vmatprep.subr.mxu0 0.0
    %1364 = vmatpush1.msra.mxu0 0.0
    %1365 = vmatprep.subr.mxu0 0.0
    %1366 = vmatpush1.msra.mxu0 0.0
    %1367 = vmatprep.subr.mxu0 0.0
    %1368 = vmatpush1.msra.mxu0 %v1231
    %1369 = vmatprep.subr.mxu0 0.0
    %1370 = vmatpush1.msra.mxu0 %v1230
    %1371 = vmatprep.subr.mxu0 0.0
    %1372 = vmatpush2.msra.mxu0 0.0
    %1373 = vmatprep.subr.mxu0 0.0
    %1374 = vmatpush2.msra.mxu0 0.0
    %1375 = vmatprep.subr.mxu0 0.0
    %1376 = vmatpush2.msra.mxu0 0.0
    %1377 = vmatprep.subr.mxu0 0.0
    %1378 = vmatpush2.msra.mxu0 0.0
    %1379 = vmatprep.subr.mxu0 0.0
    %1380 = vmatpush2.msra.mxu0 0.0
    %1381 = vmatprep.subr.mxu0 0.0
    %1382 = vmatpush2.msra.mxu0 0.0
    %1383 = vmatprep.subr.mxu0 0.0
    %1384 = vmatpush2.msra.mxu0 0.0
    %1385 = vmatprep.subr.mxu0 0.0
    %1386 = vmatpush2.msra.mxu0 0.0
    %1387 = vmatprep.subr.mxu0 0.0
    %1388 = vmatpush2.msra.mxu0 0.0
    %1389 = vmatprep.subr.mxu0 0.0
    %1390 = vmatpush2.msra.mxu0 0.0
    %1391 = vmatprep.subr.mxu0 0.0
    %1392 = vmatpush2.msra.mxu0 0.0
    %1393 = vmatprep.subr.mxu0 0.0
    %1394 = vmatpush2.msra.mxu0 0.0
    %1395 = vmatprep.subr.mxu0 0.0
    %1396 = vmatpush2.msra.mxu0 0.0
    %1397 = vmatprep.subr.mxu0 0.0
    %1398 = vmatpush2.msra.mxu0 0.0
    %1399 = vmatprep.subr.mxu0 0.0
    %1400 = vmatpush2.msra.mxu0 0.0
    %1401 = vmatprep.subr.mxu0 0.0
    %1402 = vmatpush2.msra.mxu0 0.0
    %1403 = vmatprep.mubr.f32.mxu0 0.0
    %1404 = vmatmul.mubr.f32.gmra.mxu0 %v1267
    %v1405 = vpop.f32.mrf.mxu0
    %v1406 = vadd.f32 0.0, %v1405
    %v1407 = vpop.f32.mrf.mxu0
    %1408 = vdwg.mxu0
    %v1410 = vsel %vm1142, %v1406, 0
    %1412 = vmatprep.subr.mxu0 0.0
    %1413 = vmatpush1.msra.mxu0 0.0
    %1414 = vmatprep.subr.mxu0 0.0
    %1415 = vmatpush1.msra.mxu0 0.0
    %1416 = vmatprep.subr.mxu0 0.0
    %1417 = vmatpush1.msra.mxu0 0.0
    %1418 = vmatprep.subr.mxu0 0.0
    %1419 = vmatpush1.msra.mxu0 0.0
    %1420 = vmatprep.subr.mxu0 0.0
    %1421 = vmatpush1.msra.mxu0 0.0
    %1422 = vmatprep.subr.mxu0 0.0
    %1423 = vmatpush1.msra.mxu0 0.0
    %1424 = vmatprep.subr.mxu0 0.0
    %1425 = vmatpush1.msra.mxu0 0.0
    %1426 = vmatprep.subr.mxu0 0.0
    %1427 = vmatpush1.msra.mxu0 0.0
    %1428 = vmatprep.subr.mxu0 0.0
    %1429 = vmatpush1.msra.mxu0 0.0
    %1430 = vmatprep.subr.mxu0 0.0
    %1431 = vmatpush1.msra.mxu0 0.0
    %1432 = vmatprep.subr.mxu0 0.0
    %1433 = vmatpush1.msra.mxu0 0.0
    %1434 = vmatprep.subr.mxu0 0.0
    %1435 = vmatpush1.msra.mxu0 0.0
    %1436 = vmatprep.subr.mxu0 0.0
    %1437 = vmatpush1.msra.mxu0 0.0
    %1438 = vmatprep.subr.mxu0 0.0
    %1439 = vmatpush1.msra.mxu0 0.0
    %1440 = vmatprep.subr.mxu0 0.0
    %1441 = vmatpush1.msra.mxu0 0.0
    %1442 = vmatprep.subr.mxu0 0.0
    %1443 = vmatpush1.msra.mxu0 %v54
    %1444 = vmatprep.subr.mxu0 0.0
    %1445 = vmatpush2.msra.mxu0 0.0
    %1446 = vmatprep.subr.mxu0 0.0
    %1447 = vmatpush2.msra.mxu0 0.0
    %1448 = vmatprep.subr.mxu0 0.0
    %1449 = vmatpush2.msra.mxu0 0.0
    %1450 = vmatprep.subr.mxu0 0.0
    %1451 = vmatpush2.msra.mxu0 0.0
    %1452 = vmatprep.subr.mxu0 0.0
    %1453 = vmatpush2.msra.mxu0 0.0
    %1454 = vmatprep.subr.mxu0 0.0
    %1455 = vmatpush2.msra.mxu0 0.0
    %1456 = vmatprep.subr.mxu0 0.0
    %1457 = vmatpush2.msra.mxu0 0.0
    %1458 = vmatprep.subr.mxu0 0.0
    %1459 = vmatpush2.msra.mxu0 0.0
    %1460 = vmatprep.subr.mxu0 0.0
    %1461 = vmatpush2.msra.mxu0 0.0
    %1462 = vmatprep.subr.mxu0 0.0
    %1463 = vmatpush2.msra.mxu0 0.0
    %1464 = vmatprep.subr.mxu0 0.0
    %1465 = vmatpush2.msra.mxu0 0.0
    %1466 = vmatprep.subr.mxu0 0.0
    %1467 = vmatpush2.msra.mxu0 0.0
    %1468 = vmatprep.subr.mxu0 0.0
    %1469 = vmatpush2.msra.mxu0 0.0
    %1470 = vmatprep.subr.mxu0 0.0
    %1471 = vmatpush2.msra.mxu0 0.0
    %1472 = vmatprep.subr.mxu0 0.0
    %1473 = vmatpush2.msra.mxu0 0.0
    %1474 = vmatprep.subr.mxu0 0.0
    %1475 = vmatpush2.msra.mxu0 0.0
    %1476 = vmatprep.mubr.f32.mxu0 0.0
    %1477 = vmatmul.mubr.f32.gmra.mxu0 %v1410
    %v1478 = vpop.f32.mrf.mxu0
    %v1479 = vadd.f32 0.0001, %v1478
    %v1480 = vpop.f32.mrf.mxu0
    %1481 = vdwg.mxu0
    %v1482 = vmul.f32 %v54, %v984
    %v1483 = vmul.f32 %v1482, %v1336
    %v1484 = vrcp.pop %v1479
    %v1485 = vmul.f32 %v1483, %v1484
    %1486 = vst.msk [vmem:[#allocation2] sm:$0xff] %vm987, %v1485
    // Predicated region
    $region58: #{ralmu_block.1} parent=1 // pred_check
      _
    $region59: #{ralmu_block.1} parent=1 // pred_check_branch
      %1488 = sbr.rel (0) target = $region61
    $region60: #{ralmu_block.1} parent=1 // pred_region
      _
    $region61: #{ralmu_block.1} parent=1 // pred_fallthru
      _
    // Predicated region
    $region62: #{ralmu_block.1} parent=1 // pred_check
      _
    $region63: #{ralmu_block.1} parent=1 // pred_check_branch
      %1490 = sbr.rel (0) target = $region65
    $region64: #{ralmu_block.1} parent=1 // pred_region
      %s1492 = ssub.s32 128, 128
      %1493 = vsyncadd [#allocation3], %s1492
      %s1495 = sshll.u32 [#allocation2], 4
      %s1496 = int_to_ptr.vmem [resolvable:$true] %s1495
      %1498 = dma.vmem_to_hbm [thread:$0]  %s1496, 128, %s15, [#allocation3]
    $region65: #{ralmu_block.1} parent=1 // pred_fallthru
      _
    // Predicated region
    $region66: #{ralmu_block.1} parent=1 // pred_check
      _
    $region67: #{ralmu_block.1} parent=1 // pred_check_branch
      %1500 = sbr.rel (0) target = $region69
    $region68: #{ralmu_block.1} parent=1 // pred_region
      _
    $region69: #{ralmu_block.1} parent=1 // pred_fallthru
      _
    // Predicated region
    $region70: #{ralmu_block.1} parent=1 // pred_check
      _
    $region71: #{ralmu_block.1} parent=1 // pred_check_branch
      %1502 = sbr.rel (0) target = $region73
    $region72: #{ralmu_block.1} parent=1 // pred_region
      %1503 = dma.done [#allocation3], 128
    $region73: #{ralmu_block.1} parent=1 // pred_fallthru
      _
    %1504 = vsyncpa [#allocation3], 1

</llo_original>
